<compile_context>
chip_gen: v5e
topology: v5e:2x2
jax: 0.10.0
libtpu: 0.0.40
codegen_flags: <defaults>
</compile_context>

<pallas_src>
import functools

import jax
import jax.numpy as jnp
from jax import lax
from jax.experimental import pallas as pl
from jax.experimental.pallas import tpu as pltpu


_HIGHEST = jax.lax.Precision.HIGHEST  # reference (ground truth) only


# ---------------------------------------------------------------------------
# helpers
# ---------------------------------------------------------------------------
def _round_up(x, m):
    return ((x + m - 1) // m) * m


def _apply_act(y, act):
    if act == "relu":
        return jnp.maximum(y, 0.0)
    if act == "hard_swish":
        # x * relu6(x + 3) / 6
        return y * jnp.clip(y + 3.0, 0.0, 6.0) * (1.0 / 6.0)
    return y


def _fold_bn(bn, eps=1e-5):
    scale = bn["gamma"] / jnp.sqrt(bn["var"] + eps)
    bias = bn["beta"] - bn["mean"] * scale
    return scale, bias


# ---------------------------------------------------------------------------
# Kernel A: fused (1x1 conv + BN + act) -> (depthwise kxk conv + BN + act)
#           + optional fused SE global-average-pool (partial sums over H tiles).
# ---------------------------------------------------------------------------
def _expand_dw_kernel(x_ref, w0_ref, s0_ref, b0_ref, w1_ref, s1_ref, b1_ref, *rest,
                      k, stride, act, H, W, TH, RL, pad, Wo, Ho, compute_pool):
    if compute_pool:
        o_ref, pool_ref, ybuf, pool_acc = rest
    else:
        o_ref, ybuf = rest
        pool_ref = pool_acc = None

    h = pl.program_id(1)
    Wp = W + 2 * pad
    Cmid = w0_ref.shape[1]

    # ---- conv0 (1x1 + BN + act) on the input rows this output tile needs ----
    # ybuf conceptually holds padded rows [h*TH*stride, ...) of the expanded
    # activation; everything not written below stays zero, which provides the
    # exact zero spatial padding the depthwise conv expects.
    r0p = h * (TH * stride)                      # first padded row this tile reads
    start = jnp.clip(r0p - pad, 0, H - RL)       # clamped read window into x
    dst = start - r0p + 2 * pad                  # where those rows land in ybuf

    ybuf[...] = jnp.zeros_like(ybuf)
    x_rows = x_ref[0, pl.ds(start, RL), :, :]                       # (RL, W, Cin)
    x2 = x_rows.reshape(RL * W, x_rows.shape[-1])
    e = jnp.dot(x2, w0_ref[...], preferred_element_type=jnp.float32)
    e = e * s0_ref[0] + b0_ref[0]
    e = _apply_act(e, act)
    ybuf[pl.ds(dst, RL), pad:pad + W, :] = e.reshape(RL, W, Cmid)

    # ---- depthwise kxk: one aligned row load per dh, column taps via roll ----
    acc = jnp.zeros((TH, Wp, Cmid), jnp.float32)
    for dh in range(k):
        if stride == 1:
            rows = ybuf[pl.ds(pad + dh, TH), :, :]
        else:
            rows = ybuf[pl.ds(pad + dh, TH, stride), :, :]
        for dw in range(k):
            tap = rows if dw == 0 else pltpu.roll(rows, shift=(Wp - dw) % Wp, axis=1)
            acc = acc + tap * w1_ref[dh * k + dw, :]
    if stride == 1:
        y = acc[:, :Wo, :]
    else:
        # columns were accumulated at stride 1; downsample once per tile.
        y = lax.slice(acc, (0, 0, 0), (TH, (Wo - 1) * stride + 1, Cmid),
                      (1, stride, 1))

    y = y * s1_ref[0] + b1_ref[0]
    y = _apply_act(y, act)
    o_ref[0] = y.astype(o_ref.dtype)

    if compute_pool:
        @pl.when(h == 0)
        def _():
            pool_acc[...] = jnp.zeros_like(pool_acc)

        pool_acc[...] += jnp.sum(y, axis=(0, 1)).reshape(1, Cmid)

        @pl.when(h == pl.num_programs(1) - 1)
        def _():
            pool_ref[0, 0] = pool_acc[0] * (1.0 / (Ho * Wo))


def expand_depthwise(x_nhwc, w0, bn0_scale, bn0_bias, w1_kkc, bn1_scale, bn1_bias, *,
                     kernel_size, stride, act=None, compute_pool=False, block_rows=32):
    """x_nhwc: (N, H, W, Cin); w0: (Cin, Cmid); w1_kkc: (k*k, Cmid).
    Returns (y (N, Ho, Wo, Cmid), pooled (N, Cmid) or None)."""
    N, H, W, Cin = x_nhwc.shape
    Cmid = w0.shape[1]
    k = kernel_size
    p = (k - 1) // 2
    Wp = W + 2 * p
    Ho = (H + 2 * p - k) // stride + 1
    Wo = (W + 2 * p - k) // stride + 1

    # Output-row tile: largest divisor of Ho <= block_rows (exact blocks, no
    # ragged tail, no output padding).  Fall back to the whole image if Ho has
    # no useful divisor.  TODO(synk): ragged-tail masking for prime Ho.
    TH = Ho
    for t in range(max(1, min(block_rows, Ho)), 0, -1):
        if Ho % t == 0:
            TH = t
            break
    if TH < min(8, Ho):
        TH = Ho
    NH = Ho // TH
    TH_in = (TH - 1) * stride + k            # input rows one tile needs (pre-clamp)
    RL = min(TH_in, H)                       # rows actually read from x per tile
    ybuf_rows = TH_in + 2 * p

    kernel = functools.partial(
        _expand_dw_kernel, k=k, stride=stride, act=act, H=H, W=W, TH=TH, RL=RL,
        pad=p, Wo=Wo, Ho=Ho, compute_pool=compute_pool)

    in_specs = [
        pl.BlockSpec((1, H, W, Cin), lambda n, h: (n, 0, 0, 0)),  # resident / sample
        pl.BlockSpec((Cin, Cmid), lambda n, h: (0, 0)),
        pl.BlockSpec((1, Cmid), lambda n, h: (0, 0)),
        pl.BlockSpec((1, Cmid), lambda n, h: (0, 0)),
        pl.BlockSpec((k * k, Cmid), lambda n, h: (0, 0)),
        pl.BlockSpec((1, Cmid), lambda n, h: (0, 0)),
        pl.BlockSpec((1, Cmid), lambda n, h: (0, 0)),
    ]
    args = (x_nhwc, w0, bn0_scale.reshape(1, Cmid), bn0_bias.reshape(1, Cmid),
            w1_kkc, bn1_scale.reshape(1, Cmid), bn1_bias.reshape(1, Cmid))

    out_specs = [pl.BlockSpec((1, TH, Wo, Cmid), lambda n, h: (n, h, 0, 0))]
    out_shapes = [jax.ShapeDtypeStruct((N, Ho, Wo, Cmid), x_nhwc.dtype)]
    scratch = [pltpu.VMEM((ybuf_rows, Wp, Cmid), jnp.float32)]
    if compute_pool:
        out_specs.append(pl.BlockSpec((1, 1, Cmid), lambda n, h: (n, 0, 0)))
        out_shapes.append(jax.ShapeDtypeStruct((N, 1, Cmid), jnp.float32))
        scratch.append(pltpu.VMEM((1, Cmid), jnp.float32))

    itemsize = jnp.dtype(x_nhwc.dtype).itemsize
    flops = 2 * N * H * W * Cin * Cmid + 2 * N * Ho * Wo * Cmid * k * k
    bytes_accessed = itemsize * (N * H * W * Cin + N * Ho * Wo * Cmid) \
        + 4 * Cmid * (Cin + k * k + 4)
    vmem_bytes = (2 * H * W * Cin * itemsize                 # resident input (2 bufs)
                  + 2 * 2 * TH * Wo * Cmid * itemsize        # double-buffered out
                  + ybuf_rows * Wp * Cmid * 4 + (1 << 20))
    vmem_limit = int(min(max(2 * vmem_bytes, 32 * 2**20), 100 * 2**20))

    outs = pl.pallas_call(
        kernel,
        out_shape=tuple(out_shapes) if compute_pool else out_shapes[0],
        grid=(N, NH),
        in_specs=in_specs,
        out_specs=tuple(out_specs) if compute_pool else out_specs[0],
        scratch_shapes=scratch,
        compiler_params=pltpu.CompilerParams(
            dimension_semantics=("parallel", "arbitrary"),
            vmem_limit_bytes=vmem_limit),
        cost_estimate=pl.CostEstimate(flops=int(flops), transcendentals=0,
                                      bytes_accessed=int(bytes_accessed)),
    )(*args)

    if compute_pool:
        y, pooled = outs
        return y, pooled.reshape(N, Cmid)
    return outs, None


# ---------------------------------------------------------------------------
# Kernel B: fused 1x1 conv (matmul over channels) + BN (+ act)
#           with optional SE channel scale on the input and residual add.
# ---------------------------------------------------------------------------
def _pointwise_kernel(x_ref, w_ref, scale_ref, bias_ref, *rest,
                      act, fuse_se, fuse_residual):
    i = 0
    se_ref = res_ref = None
    if fuse_se:
        se_ref = rest[i]; i += 1
    if fuse_residual:
        res_ref = rest[i]; i += 1
    o_ref = rest[i]

    x = x_ref[0]                                           # (TP, Cin)
    if fuse_se:
        x = x * se_ref[0, 0]                               # per-sample (Cin,) scale
    y = jnp.dot(x, w_ref[...], preferred_element_type=jnp.float32)
    y = y * scale_ref[0] + bias_ref[0]
    y = _apply_act(y, act)
    if fuse_residual:
        y = y + res_ref[0]
    o_ref[0] = y.astype(o_ref.dtype)


def pointwise_conv_bn_act(x, w, bn_scale, bn_bias, *, act=None,
                          se_scale=None, residual=None, block_rows=2048):
    """x: (N, P, Cin)  w: (Cin, Cout)  bn_*: (Cout,)
    se_scale: optional (N, Cin) per-sample channel scale on the input.
    residual: optional (N, P, Cout) added to the output.  Returns (N, P, Cout)."""
    N, P, Cin = x.shape
    Cout = w.shape[1]
    itemsize = jnp.dtype(x.dtype).itemsize

    # Row tile: prefer a divisor of P that is a multiple of 8 (no jnp.pad HBM copy).
    TP = None
    if P % 8 == 0:
        t = min(block_rows, P)
        t -= t % 8
        while t >= 8:
            if P % t == 0:
                TP = t
                break
            t -= 8
    pp = P
    if TP is None:
        TP = min(_round_up(block_rows, 8), _round_up(P, 8))
        pp = _round_up(P, TP)
        padcfg = ((0, 0), (0, pp - P), (0, 0))
        x = jnp.pad(x, padcfg)
        if residual is not None:
            residual = jnp.pad(residual, padcfg)

    in_specs = [
        pl.BlockSpec((1, TP, Cin), lambda n, q: (n, q, 0)),
        pl.BlockSpec((Cin, Cout), lambda n, q: (0, 0)),
        pl.BlockSpec((1, Cout), lambda n, q: (0, 0)),
        pl.BlockSpec((1, Cout), lambda n, q: (0, 0)),
    ]
    args = [x, w, bn_scale.reshape(1, Cout), bn_bias.reshape(1, Cout)]
    if se_scale is not None:
        in_specs.append(pl.BlockSpec((1, 1, Cin), lambda n, q: (n, 0, 0)))
        args.append(se_scale.reshape(N, 1, Cin))
    if residual is not None:
        in_specs.append(pl.BlockSpec((1, TP, Cout), lambda n, q: (n, q, 0)))
        args.append(residual)

    kernel = functools.partial(_pointwise_kernel, act=act,
                               fuse_se=se_scale is not None,
                               fuse_residual=residual is not None)
    flops = 2 * N * pp * Cin * Cout
    bytes_accessed = itemsize * (N * pp * (Cin + Cout) + Cin * Cout
                                 + (N * pp * Cout if residual is not None else 0))
    vmem_bytes = 2 * 2 * TP * (Cin + Cout + (Cout if residual is not None else 0)) \
        * itemsize + Cin * Cout * itemsize + (1 << 20)

    out = pl.pallas_call(
        kernel,
        out_shape=jax.ShapeDtypeStruct((N, pp, Cout), x.dtype),
        grid=(N, pp // TP),
        in_specs=in_specs,
        out_specs=pl.BlockSpec((1, TP, Cout), lambda n, q: (n, q, 0)),
        compiler_params=pltpu.CompilerParams(
            dimension_semantics=("parallel", "parallel"),
            vmem_limit_bytes=int(min(max(2 * vmem_bytes, 32 * 2**20), 100 * 2**20))),
        cost_estimate=pl.CostEstimate(flops=int(flops), transcendentals=0,
                                      bytes_accessed=int(bytes_accessed)),
    )(*args)
    return out if pp == P else out[:, :P, :]


# ---------------------------------------------------------------------------
# SE attention: two tiny FCs on (N, C) — plain XLA (pallas launch would dominate).
# ---------------------------------------------------------------------------
def se_attention(pooled, w1, b1, w2, b2, slope=0.2, offset=0.5):
    h = jnp.maximum(pooled @ w1 + b1, 0.0)
    return jnp.clip(slope * (h @ w2 + b2) + offset, 0.0, 1.0)


# ---------------------------------------------------------------------------
# ResidualUnit forward (Pallas version)
# ---------------------------------------------------------------------------
def residual_unit_forward(x_nchw, params, *, stride, kernel_size, act=None,
                          use_se=False, pw_block_rows=2048, dw_block_rows=32):
    N, Cin, H, W = x_nchw.shape
    Cmid = params["w0"].shape[1]
    Cout = params["w2"].shape[1]
    not_add = (Cin != Cout) or (stride != 1)

    x = jnp.transpose(x_nchw, (0, 2, 3, 1))            # NHWC: channels lane-dense

    s0, b0 = _fold_bn(params["bn0"])
    s1, b1 = _fold_bn(params["bn1"])
    s2, b2 = _fold_bn(params["bn2"])

    # conv0 + conv1 fused: the expanded Cmid activation never round-trips HBM.
    y, pooled = expand_depthwise(x, params["w0"], s0, b0, params["w1"], s1, b1,
                                 kernel_size=kernel_size, stride=stride, act=act,
                                 compute_pool=use_se, block_rows=dw_block_rows)
    _, Ho, Wo, _ = y.shape

    se_scale = None
    if use_se:
        se_scale = se_attention(pooled, params["se_w1"], params["se_b1"],
                                params["se_w2"], params["se_b2"])

    # conv2: 1x1 conv + BN, with fused SE input scale and fused residual add.
    residual = None if not_add else x.reshape(N, H * W, Cin)
    out = pointwise_conv_bn_act(y.reshape(N, Ho * Wo, Cmid), params["w2"], s2, b2,
                                act=None, se_scale=se_scale, residual=residual,
                                block_rows=pw_block_rows)
    out = out.reshape(N, Ho, Wo, Cout)
    return jnp.transpose(out, (0, 3, 1, 2))            # back to NCHW


# ---------------------------------------------------------------------------
# Pure-JAX reference (same semantics as the PyTorch module, inference BN)
# ---------------------------------------------------------------------------
def ref_residual_unit(x_nchw, params, *, stride, kernel_size, act=None, use_se=False):
    N, Cin, H, W = x_nchw.shape
    Cout = params["w2"].shape[1]
    not_add = (Cin != Cout) or (stride != 1)
    k = kernel_size
    p = (k - 1) // 2
    x = jnp.transpose(x_nchw, (0, 2, 3, 1))

    def bn(z, bnp):
        scale = bnp["gamma"] / jnp.sqrt(bnp["var"] + 1e-5)
        return z * scale + (bnp["beta"] - bnp["mean"] * scale)

    def a(z):
        return _apply_act(z, act)

    y = jnp.einsum("nhwc,cd->nhwd", x, params["w0"], precision=_HIGHEST)
    y = a(bn(y, params["bn0"]))

    C = y.shape[-1]
    rhs = params["w1"].reshape(k, k, 1, C)
    y = lax.conv_general_dilated(y, rhs, window_strides=(stride, stride),
                                 padding=((p, p), (p, p)),
                                 dimension_numbers=("NHWC", "HWIO", "NHWC"),
                                 feature_group_count=C, precision=_HIGHEST)
    y = a(bn(y, params["bn1"]))

    if use_se:
        pooled = jnp.mean(y, axis=(1, 2))
        h = jnp.maximum(pooled @ params["se_w1"] + params["se_b1"], 0.0)
        attn = jnp.clip(0.2 * (h @ params["se_w2"] + params["se_b2"]) + 0.5, 0.0, 1.0)
        y = y * attn[:, None, None, :]

    y = jnp.einsum("nhwc,cd->nhwd", y, params["w2"], precision=_HIGHEST)
    y = bn(y, params["bn2"])
    if not not_add:
        y = y + x
    return jnp.transpose(y, (0, 3, 1, 2))


# ---------------------------------------------------------------------------
if __name__ == "__main__":
    N, C_in, H, W = 2, 8, 16, 16
    C_mid, C_out = 16, 8
    kernel_size, stride = 3, 1
    act = "hard_swish"
    use_se = True

    key = jax.random.PRNGKey(0)
    ks = jax.random.split(key, 16)

    def normal(k_, shape, s):
        return jax.random.normal(k_, shape, dtype=jnp.float32) * s

    def bn_params(k_, dim):
        kg, kb, km, kv = jax.random.split(k_, 4)
        return dict(
            gamma=jax.random.uniform(kg, (dim,), dtype=jnp.float32, minval=0.5, maxval=1.5),
            beta=normal(kb, (dim,), 0.1),
            mean=normal(km, (dim,), 0.1),
            var=jax.random.uniform(kv, (dim,), dtype=jnp.float32, minval=0.5, maxval=1.5),
        )

    params = {
        "w0": normal(ks[0], (C_in, C_mid), 0.3),
        "bn0": bn_params(ks[1], C_mid),
        "w1": normal(ks[2], (kernel_size * kernel_size, C_mid), 0.3),
        "bn1": bn_params(ks[3], C_mid),
        "se_w1": normal(ks[4], (C_mid, C_mid // 4), 0.3),
        "se_b1": normal(ks[5], (C_mid // 4,), 0.1),
        "se_w2": normal(ks[6], (C_mid // 4, C_mid), 0.3),
        "se_b2": normal(ks[7], (C_mid,), 0.1),
        "w2": normal(ks[8], (C_mid, C_out), 0.3),
        "bn2": bn_params(ks[9], C_out),
    }

    x = jax.random.normal(ks[10], (N, C_in, H, W), dtype=jnp.float32)

    # Small tile sizes so the H-tiled depthwise path (halo + pool partial sums)
    # and the P-tiled pointwise path are both exercised at these tiny shapes.
    fwd = jax.jit(functools.partial(residual_unit_forward, stride=stride,
                                    kernel_size=kernel_size, act=act,
                                    use_se=use_se, pw_block_rows=128,
                                    dw_block_rows=8))
    out = jax.block_until_ready(fwd(x, params))

    ref = ref_residual_unit(x, params, stride=stride, kernel_size=kernel_size,
                            act=act, use_se=use_se)
    assert out.shape == ref.shape and out.dtype == x.dtype
    # Tolerance accounts for default (non-HIGHEST) MXU matmul precision in the
    # kernels vs the HIGHEST-precision reference; real bugs produce O(0.1+) errors.
    err = float(jnp.max(jnp.abs(out - ref)))
    assert err < 2e-2, f"max abs err too large: {err}"
    print("KERNEL_OK")
</pallas_src>

<mosaic_0001>
module attributes {stable_mosaic.version = 11 : i64} {
  func.func @_expand_dw_kernel(%arg0: i32, %arg1: i32, %arg2: memref<1x16x16x8xf32, #tpu.memory_space<vmem>>, %arg3: memref<8x16xf32, #tpu.memory_space<vmem>>, %arg4: memref<1x16xf32, #tpu.memory_space<vmem>>, %arg5: memref<1x16xf32, #tpu.memory_space<vmem>>, %arg6: memref<9x16xf32, #tpu.memory_space<vmem>>, %arg7: memref<1x16xf32, #tpu.memory_space<vmem>>, %arg8: memref<1x16xf32, #tpu.memory_space<vmem>>, %arg9: memref<1x8x16x16xf32, #tpu.memory_space<vmem>>, %arg10: memref<1x1x16xf32, #tpu.memory_space<vmem>>, %arg11: memref<12x18x16xf32, #tpu.memory_space<vmem>>, %arg12: memref<1x16xf32, #tpu.memory_space<vmem>>) attributes {dimension_semantics = [#tpu.dimension_semantics<parallel>, #tpu.dimension_semantics<arbitrary>], iteration_bounds = array<i64: 2, 2>, scalar_prefetch = 0 : i64, scratch_operands = 2 : i64, tpu.core_type = #tpu.core_type<tc>, window_params = [{transform_indices = @transform_0, window_bounds = array<i64: 1, 16, 16, 8>}, {pipeline_mode = #tpu.pipeline_mode<synchronous>, transform_indices = @transform_1, window_bounds = array<i64: 8, 16>}, {pipeline_mode = #tpu.pipeline_mode<synchronous>, transform_indices = @transform_2, window_bounds = array<i64: 1, 16>}, {pipeline_mode = #tpu.pipeline_mode<synchronous>, transform_indices = @transform_3, window_bounds = array<i64: 1, 16>}, {pipeline_mode = #tpu.pipeline_mode<synchronous>, transform_indices = @transform_4, window_bounds = array<i64: 9, 16>}, {pipeline_mode = #tpu.pipeline_mode<synchronous>, transform_indices = @transform_5, window_bounds = array<i64: 1, 16>}, {pipeline_mode = #tpu.pipeline_mode<synchronous>, transform_indices = @transform_6, window_bounds = array<i64: 1, 16>}, {transform_indices = @transform_7, window_bounds = array<i64: 1, 8, 16, 16>}, {transform_indices = @transform_8, window_bounds = array<i64: 1, 1, 16>}]} {
    %c8_i32 = arith.constant 8 : i32
    %0 = arith.muli %arg1, %c8_i32 : i32
    %c1_i32 = arith.constant 1 : i32
    %1 = arith.subi %0, %c1_i32 : i32
    %c0_i32 = arith.constant 0 : i32
    %c6_i32 = arith.constant 6 : i32
    %2 = arith.maxsi %c0_i32, %1 : i32
    %3 = arith.minsi %c6_i32, %2 : i32
    %4 = arith.subi %3, %0 : i32
    %c2_i32 = arith.constant 2 : i32
    %5 = arith.addi %4, %c2_i32 : i32
    %cst = arith.constant 0.000000e+00 : f32
    %6 = vector.broadcast %cst : f32 to vector<12x18x16xf32>
    %c0 = arith.constant 0 : index
    %c0_0 = arith.constant 0 : index
    %c0_1 = arith.constant 0 : index
    %7 = vector.load %arg11[%c0, %c0_0, %c0_1] : memref<12x18x16xf32, #tpu.memory_space<vmem>>, vector<12x18x16xf32>
    tpu.vector_store %arg11[%c0, %c0_0, %c0_1], %6 {strides = array<i32>} : memref<12x18x16xf32, #tpu.memory_space<vmem>>, vector<12x18x16xf32>,
    %c0_2 = arith.constant 0 : index
    %8 = arith.index_cast %3 : i32 to index
    %c0_3 = arith.constant 0 : index
    %c0_4 = arith.constant 0 : index
    %9 = vector.load %arg2[%c0_2, %8, %c0_3, %c0_4] : memref<1x16x16x8xf32, #tpu.memory_space<vmem>>, vector<1x10x16x8xf32>
    %10 = vector.shape_cast %9 : vector<1x10x16x8xf32> to vector<10x16x8xf32>
    %11 = vector.shape_cast %10 : vector<10x16x8xf32> to vector<160x8xf32>
    %c0_5 = arith.constant 0 : index
    %c0_6 = arith.constant 0 : index
    %12 = vector.load %arg3[%c0_5, %c0_6] : memref<8x16xf32, #tpu.memory_space<vmem>>, vector<8x16xf32>
    %cst_7 = arith.constant dense<0.000000e+00> : vector<160x16xf32>
    %13 = tpu.matmul %11, %12, %cst_7 {dimension_numbers = #tpu.dot_dimension_numbers<[1], [0], [0], [1], [0, 0, 1, 1], [], []>} : vector<160x8xf32>, vector<8x16xf32>, vector<160x16xf32> -> vector<160x16xf32>
    %c0_8 = arith.constant 0 : index
    %c0_9 = arith.constant 0 : index
    %14 = vector.load %arg4[%c0_8, %c0_9] : memref<1x16xf32, #tpu.memory_space<vmem>>, vector<1x16xf32>
    %15 = vector.shape_cast %14 : vector<1x16xf32> to vector<16xf32>
    %16 = vector.shape_cast %15 : vector<16xf32> to vector<1x16xf32>
    %17 = vector.broadcast %16 : vector<1x16xf32> to vector<160x16xf32>
    %18 = arith.mulf %13, %17 : vector<160x16xf32>
    %c0_10 = arith.constant 0 : index
    %c0_11 = arith.constant 0 : index
    %19 = vector.load %arg5[%c0_10, %c0_11] : memref<1x16xf32, #tpu.memory_space<vmem>>, vector<1x16xf32>
    %20 = vector.shape_cast %19 : vector<1x16xf32> to vector<16xf32>
    %21 = vector.shape_cast %20 : vector<16xf32> to vector<1x16xf32>
    %22 = vector.broadcast %21 : vector<1x16xf32> to vector<160x16xf32>
    %23 = arith.addf %18, %22 : vector<160x16xf32>
    %cst_12 = arith.constant 3.000000e+00 : f32
    %24 = vector.broadcast %cst_12 : f32 to vector<160x16xf32>
    %25 = arith.addf %23, %24 : vector<160x16xf32>
    %cst_13 = arith.constant 0.000000e+00 : f32
    %cst_14 = arith.constant 6.000000e+00 : f32
    %26 = vector.broadcast %cst_13 : f32 to vector<160x16xf32>
    %27 = arith.maximumf %26, %25 : vector<160x16xf32>
    %28 = vector.broadcast %cst_14 : f32 to vector<160x16xf32>
    %29 = arith.minimumf %28, %27 : vector<160x16xf32>
    %30 = arith.mulf %23, %29 : vector<160x16xf32>
    %cst_15 = arith.constant 0.166666672 : f32
    %31 = vector.broadcast %cst_15 : f32 to vector<160x16xf32>
    %32 = arith.mulf %30, %31 : vector<160x16xf32>
    %33 = vector.shape_cast %32 : vector<160x16xf32> to vector<10x16x16xf32>
    %34 = arith.index_cast %5 : i32 to index
    %c1 = arith.constant 1 : index
    %c0_16 = arith.constant 0 : index
    %35 = vector.load %arg11[%34, %c1, %c0_16] : memref<12x18x16xf32, #tpu.memory_space<vmem>>, vector<10x16x16xf32>
    tpu.vector_store %arg11[%34, %c1, %c0_16], %33 {strides = array<i32>} : memref<12x18x16xf32, #tpu.memory_space<vmem>>, vector<10x16x16xf32>,
    %cst_17 = arith.constant 0.000000e+00 : f32
    %36 = vector.broadcast %cst_17 : f32 to vector<8x18x16xf32>
    %c1_18 = arith.constant 1 : index
    %c0_19 = arith.constant 0 : index
    %c0_20 = arith.constant 0 : index
    %37 = vector.load %arg11[%c1_18, %c0_19, %c0_20] : memref<12x18x16xf32, #tpu.memory_space<vmem>>, vector<8x18x16xf32>
    %c0_21 = arith.constant 0 : index
    %c0_22 = arith.constant 0 : index
    %38 = vector.load %arg6[%c0_21, %c0_22] : memref<9x16xf32, #tpu.memory_space<vmem>>, vector<1x16xf32>
    %39 = vector.shape_cast %38 : vector<1x16xf32> to vector<16xf32>
    %40 = vector.shape_cast %39 : vector<16xf32> to vector<1x1x16xf32>
    %41 = vector.broadcast %40 : vector<1x1x16xf32> to vector<8x18x16xf32>
    %42 = arith.mulf %37, %41 : vector<8x18x16xf32>
    %43 = arith.addf %36, %42 : vector<8x18x16xf32>
    %c17_i32 = arith.constant 17 : i32
    %44 = tpu.dynamic_rotate %37 by %c17_i32 dim 1 : vector<8x18x16xf32>, i32 -> vector<8x18x16xf32>
    %c1_23 = arith.constant 1 : index
    %c0_24 = arith.constant 0 : index
    %45 = vector.load %arg6[%c1_23, %c0_24] : memref<9x16xf32, #tpu.memory_space<vmem>>, vector<1x16xf32>
    %46 = vector.shape_cast %45 : vector<1x16xf32> to vector<16xf32>
    %47 = vector.shape_cast %46 : vector<16xf32> to vector<1x1x16xf32>
    %48 = vector.broadcast %47 : vector<1x1x16xf32> to vector<8x18x16xf32>
    %49 = arith.mulf %44, %48 : vector<8x18x16xf32>
    %50 = arith.addf %43, %49 : vector<8x18x16xf32>
    %c16_i32 = arith.constant 16 : i32
    %51 = tpu.dynamic_rotate %37 by %c16_i32 dim 1 : vector<8x18x16xf32>, i32 -> vector<8x18x16xf32>
    %c2 = arith.constant 2 : index
    %c0_25 = arith.constant 0 : index
    %52 = vector.load %arg6[%c2, %c0_25] : memref<9x16xf32, #tpu.memory_space<vmem>>, vector<1x16xf32>
    %53 = vector.shape_cast %52 : vector<1x16xf32> to vector<16xf32>
    %54 = vector.shape_cast %53 : vector<16xf32> to vector<1x1x16xf32>
    %55 = vector.broadcast %54 : vector<1x1x16xf32> to vector<8x18x16xf32>
    %56 = arith.mulf %51, %55 : vector<8x18x16xf32>
    %57 = arith.addf %50, %56 : vector<8x18x16xf32>
    %c2_26 = arith.constant 2 : index
    %c0_27 = arith.constant 0 : index
    %c0_28 = arith.constant 0 : index
    %58 = vector.load %arg11[%c2_26, %c0_27, %c0_28] : memref<12x18x16xf32, #tpu.memory_space<vmem>>, vector<8x18x16xf32>
    %c3 = arith.constant 3 : index
    %c0_29 = arith.constant 0 : index
    %59 = vector.load %arg6[%c3, %c0_29] : memref<9x16xf32, #tpu.memory_space<vmem>>, vector<1x16xf32>
    %60 = vector.shape_cast %59 : vector<1x16xf32> to vector<16xf32>
    %61 = vector.shape_cast %60 : vector<16xf32> to vector<1x1x16xf32>
    %62 = vector.broadcast %61 : vector<1x1x16xf32> to vector<8x18x16xf32>
    %63 = arith.mulf %58, %62 : vector<8x18x16xf32>
    %64 = arith.addf %57, %63 : vector<8x18x16xf32>
    %c17_i32_30 = arith.constant 17 : i32
    %65 = tpu.dynamic_rotate %58 by %c17_i32_30 dim 1 : vector<8x18x16xf32>, i32 -> vector<8x18x16xf32>
    %c4 = arith.constant 4 : index
    %c0_31 = arith.constant 0 : index
    %66 = vector.load %arg6[%c4, %c0_31] : memref<9x16xf32, #tpu.memory_space<vmem>>, vector<1x16xf32>
    %67 = vector.shape_cast %66 : vector<1x16xf32> to vector<16xf32>
    %68 = vector.shape_cast %67 : vector<16xf32> to vector<1x1x16xf32>
    %69 = vector.broadcast %68 : vector<1x1x16xf32> to vector<8x18x16xf32>
    %70 = arith.mulf %65, %69 : vector<8x18x16xf32>
    %71 = arith.addf %64, %70 : vector<8x18x16xf32>
    %c16_i32_32 = arith.constant 16 : i32
    %72 = tpu.dynamic_rotate %58 by %c16_i32_32 dim 1 : vector<8x18x16xf32>, i32 -> vector<8x18x16xf32>
    %c5 = arith.constant 5 : index
    %c0_33 = arith.constant 0 : index
    %73 = vector.load %arg6[%c5, %c0_33] : memref<9x16xf32, #tpu.memory_space<vmem>>, vector<1x16xf32>
    %74 = vector.shape_cast %73 : vector<1x16xf32> to vector<16xf32>
    %75 = vector.shape_cast %74 : vector<16xf32> to vector<1x1x16xf32>
    %76 = vector.broadcast %75 : vector<1x1x16xf32> to vector<8x18x16xf32>
    %77 = arith.mulf %72, %76 : vector<8x18x16xf32>
    %78 = arith.addf %71, %77 : vector<8x18x16xf32>
    %c3_34 = arith.constant 3 : index
    %c0_35 = arith.constant 0 : index
    %c0_36 = arith.constant 0 : index
    %79 = vector.load %arg11[%c3_34, %c0_35, %c0_36] : memref<12x18x16xf32, #tpu.memory_space<vmem>>, vector<8x18x16xf32>
    %c6 = arith.constant 6 : index
    %c0_37 = arith.constant 0 : index
    %80 = vector.load %arg6[%c6, %c0_37] : memref<9x16xf32, #tpu.memory_space<vmem>>, vector<1x16xf32>
    %81 = vector.shape_cast %80 : vector<1x16xf32> to vector<16xf32>
    %82 = vector.shape_cast %81 : vector<16xf32> to vector<1x1x16xf32>
    %83 = vector.broadcast %82 : vector<1x1x16xf32> to vector<8x18x16xf32>
    %84 = arith.mulf %79, %83 : vector<8x18x16xf32>
    %85 = arith.addf %78, %84 : vector<8x18x16xf32>
    %c17_i32_38 = arith.constant 17 : i32
    %86 = tpu.dynamic_rotate %79 by %c17_i32_38 dim 1 : vector<8x18x16xf32>, i32 -> vector<8x18x16xf32>
    %c7 = arith.constant 7 : index
    %c0_39 = arith.constant 0 : index
    %87 = vector.load %arg6[%c7, %c0_39] : memref<9x16xf32, #tpu.memory_space<vmem>>, vector<1x16xf32>
    %88 = vector.shape_cast %87 : vector<1x16xf32> to vector<16xf32>
    %89 = vector.shape_cast %88 : vector<16xf32> to vector<1x1x16xf32>
    %90 = vector.broadcast %89 : vector<1x1x16xf32> to vector<8x18x16xf32>
    %91 = arith.mulf %86, %90 : vector<8x18x16xf32>
    %92 = arith.addf %85, %91 : vector<8x18x16xf32>
    %c16_i32_40 = arith.constant 16 : i32
    %93 = tpu.dynamic_rotate %79 by %c16_i32_40 dim 1 : vector<8x18x16xf32>, i32 -> vector<8x18x16xf32>
    %c8 = arith.constant 8 : index
    %c0_41 = arith.constant 0 : index
    %94 = vector.load %arg6[%c8, %c0_41] : memref<9x16xf32, #tpu.memory_space<vmem>>, vector<1x16xf32>
    %95 = vector.shape_cast %94 : vector<1x16xf32> to vector<16xf32>
    %96 = vector.shape_cast %95 : vector<16xf32> to vector<1x1x16xf32>
    %97 = vector.broadcast %96 : vector<1x1x16xf32> to vector<8x18x16xf32>
    %98 = arith.mulf %93, %97 : vector<8x18x16xf32>
    %99 = arith.addf %92, %98 : vector<8x18x16xf32>
    %100 = vector.extract_strided_slice %99 {offsets = [0, 0, 0], sizes = [8, 16, 16], strides = [1, 1, 1]} : vector<8x18x16xf32> to vector<8x16x16xf32>
    %c0_42 = arith.constant 0 : index
    %c0_43 = arith.constant 0 : index
    %101 = vector.load %arg7[%c0_42, %c0_43] : memref<1x16xf32, #tpu.memory_space<vmem>>, vector<1x16xf32>
    %102 = vector.shape_cast %101 : vector<1x16xf32> to vector<16xf32>
    %103 = vector.shape_cast %102 : vector<16xf32> to vector<1x1x16xf32>
    %104 = vector.broadcast %103 : vector<1x1x16xf32> to vector<8x16x16xf32>
    %105 = arith.mulf %100, %104 : vector<8x16x16xf32>
    %c0_44 = arith.constant 0 : index
    %c0_45 = arith.constant 0 : index
    %106 = vector.load %arg8[%c0_44, %c0_45] : memref<1x16xf32, #tpu.memory_space<vmem>>, vector<1x16xf32>
    %107 = vector.shape_cast %106 : vector<1x16xf32> to vector<16xf32>
    %108 = vector.shape_cast %107 : vector<16xf32> to vector<1x1x16xf32>
    %109 = vector.broadcast %108 : vector<1x1x16xf32> to vector<8x16x16xf32>
    %110 = arith.addf %105, %109 : vector<8x16x16xf32>
    %cst_46 = arith.constant 3.000000e+00 : f32
    %111 = vector.broadcast %cst_46 : f32 to vector<8x16x16xf32>
    %112 = arith.addf %110, %111 : vector<8x16x16xf32>
    %cst_47 = arith.constant 0.000000e+00 : f32
    %cst_48 = arith.constant 6.000000e+00 : f32
    %113 = vector.broadcast %cst_47 : f32 to vector<8x16x16xf32>
    %114 = arith.maximumf %113, %112 : vector<8x16x16xf32>
    %115 = vector.broadcast %cst_48 : f32 to vector<8x16x16xf32>
    %116 = arith.minimumf %115, %114 : vector<8x16x16xf32>
    %117 = arith.mulf %110, %116 : vector<8x16x16xf32>
    %cst_49 = arith.constant 0.166666672 : f32
    %118 = vector.broadcast %cst_49 : f32 to vector<8x16x16xf32>
    %119 = arith.mulf %117, %118 : vector<8x16x16xf32>
    %c0_50 = arith.constant 0 : index
    %c0_51 = arith.constant 0 : index
    %c0_52 = arith.constant 0 : index
    %c0_53 = arith.constant 0 : index
    %120 = vector.load %arg9[%c0_50, %c0_51, %c0_52, %c0_53] : memref<1x8x16x16xf32, #tpu.memory_space<vmem>>, vector<1x8x16x16xf32>
    %121 = vector.shape_cast %120 : vector<1x8x16x16xf32> to vector<8x16x16xf32>
    %122 = vector.shape_cast %119 : vector<8x16x16xf32> to vector<1x8x16x16xf32>
    tpu.vector_store %arg9[%c0_50, %c0_51, %c0_52, %c0_53], %122 {strides = array<i32>} : memref<1x8x16x16xf32, #tpu.memory_space<vmem>>, vector<1x8x16x16xf32>,
    %c0_i32_54 = arith.constant 0 : i32
    %123 = arith.cmpi eq, %arg1, %c0_i32_54 : i32
    %124 = arith.extui %123 : i1 to i32
    %c0_i32_55 = arith.constant 0 : i32
    %125 = arith.cmpi ne, %124, %c0_i32_55 : i32
    scf.if %125 {
      %cst_63 = arith.constant 0.000000e+00 : f32
      %134 = vector.broadcast %cst_63 : f32 to vector<1x16xf32>
      %c0_64 = arith.constant 0 : index
      %c0_65 = arith.constant 0 : index
      %135 = vector.load %arg12[%c0_64, %c0_65] : memref<1x16xf32, #tpu.memory_space<vmem>>, vector<1x16xf32>
      tpu.vector_store %arg12[%c0_64, %c0_65], %134 {strides = array<i32>} : memref<1x16xf32, #tpu.memory_space<vmem>>, vector<1x16xf32>,
    } else {
    }
    %c0_56 = arith.constant 0 : index
    %c0_57 = arith.constant 0 : index
    %126 = vector.load %arg12[%c0_56, %c0_57] : memref<1x16xf32, #tpu.memory_space<vmem>>, vector<1x16xf32>
    %cst_58 = arith.constant dense<0.000000e+00> : vector<16xf32>
    %127 = vector.multi_reduction <add>, %119, %cst_58 [0, 1] : vector<8x16x16xf32> to vector<16xf32>
    %128 = vector.shape_cast %127 : vector<16xf32> to vector<1x16xf32>
    %129 = arith.addf %126, %128 : vector<1x16xf32>
    %c0_59 = arith.constant 0 : index
    %c0_60 = arith.constant 0 : index
    %130 = vector.load %arg12[%c0_59, %c0_60] : memref<1x16xf32, #tpu.memory_space<vmem>>, vector<1x16xf32>
    tpu.vector_store %arg12[%c0_59, %c0_60], %129 {strides = array<i32>} : memref<1x16xf32, #tpu.memory_space<vmem>>, vector<1x16xf32>,
    %c1_i32_61 = arith.constant 1 : i32
    %131 = arith.cmpi eq, %arg1, %c1_i32_61 : i32
    %132 = arith.extui %131 : i1 to i32
    %c0_i32_62 = arith.constant 0 : i32
    %133 = arith.cmpi ne, %132, %c0_i32_62 : i32
    scf.if %133 {
      %c0_63 = arith.constant 0 : index
      %c0_64 = arith.constant 0 : index
      %134 = vector.load %arg12[%c0_63, %c0_64] : memref<1x16xf32, #tpu.memory_space<vmem>>, vector<1x16xf32>
      %135 = vector.shape_cast %134 : vector<1x16xf32> to vector<16xf32>
      %cst_65 = arith.constant 3.906250e-03 : f32
      %136 = vector.broadcast %cst_65 : f32 to vector<16xf32>
      %137 = arith.mulf %135, %136 : vector<16xf32>
      %c0_66 = arith.constant 0 : index
      %c0_67 = arith.constant 0 : index
      %c0_68 = arith.constant 0 : index
      %138 = vector.load %arg10[%c0_66, %c0_67, %c0_68] : memref<1x1x16xf32, #tpu.memory_space<vmem>>, vector<1x1x16xf32>
      %139 = vector.shape_cast %138 : vector<1x1x16xf32> to vector<16xf32>
      %140 = vector.shape_cast %137 : vector<16xf32> to vector<1x1x16xf32>
      tpu.vector_store %arg10[%c0_66, %c0_67, %c0_68], %140 {strides = array<i32>} : memref<1x1x16xf32, #tpu.memory_space<vmem>>, vector<1x1x16xf32>,
    } else {
    }
    return
  }
  func.func @transform_0(%arg0: i32, %arg1: i32) -> (i32, i32, i32, i32) {
    %c0_i32 = arith.constant 0 : i32
    %c0_i32_0 = arith.constant 0 : i32
    %c0_i32_1 = arith.constant 0 : i32
    %c0_i32_2 = arith.constant 0 : i32
    return %arg0, %c0_i32, %c0_i32_0, %c0_i32_1 : i32, i32, i32, i32
  }
  func.func @transform_1(%arg0: i32, %arg1: i32) -> (i32, i32) {
    %c0_i32 = arith.constant 0 : i32
    %c0_i32_0 = arith.constant 0 : i32
    %c0_i32_1 = arith.constant 0 : i32
    return %c0_i32, %c0_i32_0 : i32, i32
  }
  func.func @transform_2(%arg0: i32, %arg1: i32) -> (i32, i32) {
    %c0_i32 = arith.constant 0 : i32
    %c0_i32_0 = arith.constant 0 : i32
    %c0_i32_1 = arith.constant 0 : i32
    return %c0_i32, %c0_i32_0 : i32, i32
  }
  func.func @transform_3(%arg0: i32, %arg1: i32) -> (i32, i32) {
    %c0_i32 = arith.constant 0 : i32
    %c0_i32_0 = arith.constant 0 : i32
    %c0_i32_1 = arith.constant 0 : i32
    return %c0_i32, %c0_i32_0 : i32, i32
  }
  func.func @transform_4(%arg0: i32, %arg1: i32) -> (i32, i32) {
    %c0_i32 = arith.constant 0 : i32
    %c0_i32_0 = arith.constant 0 : i32
    %c0_i32_1 = arith.constant 0 : i32
    return %c0_i32, %c0_i32_0 : i32, i32
  }
  func.func @transform_5(%arg0: i32, %arg1: i32) -> (i32, i32) {
    %c0_i32 = arith.constant 0 : i32
    %c0_i32_0 = arith.constant 0 : i32
    %c0_i32_1 = arith.constant 0 : i32
    return %c0_i32, %c0_i32_0 : i32, i32
  }
  func.func @transform_6(%arg0: i32, %arg1: i32) -> (i32, i32) {
    %c0_i32 = arith.constant 0 : i32
    %c0_i32_0 = arith.constant 0 : i32
    %c0_i32_1 = arith.constant 0 : i32
    return %c0_i32, %c0_i32_0 : i32, i32
  }
  func.func @transform_7(%arg0: i32, %arg1: i32) -> (i32, i32, i32, i32) {
    %c0_i32 = arith.constant 0 : i32
    %c0_i32_0 = arith.constant 0 : i32
    %c0_i32_1 = arith.constant 0 : i32
    return %arg0, %arg1, %c0_i32, %c0_i32_0 : i32, i32, i32, i32
  }
  func.func @transform_8(%arg0: i32, %arg1: i32) -> (i32, i32, i32) {
    %c0_i32 = arith.constant 0 : i32
    %c0_i32_0 = arith.constant 0 : i32
    %c0_i32_1 = arith.constant 0 : i32
    return %arg0, %c0_i32, %c0_i32_0 : i32, i32, i32
  }
}

module attributes {stable_mosaic.version = 11 : i64} {
  func.func @_pointwise_kernel(%arg0: i32, %arg1: i32, %arg2: memref<1x128x16xf32, #tpu.memory_space<vmem>>, %arg3: memref<16x8xf32, #tpu.memory_space<vmem>>, %arg4: memref<1x8xf32, #tpu.memory_space<vmem>>, %arg5: memref<1x8xf32, #tpu.memory_space<vmem>>, %arg6: memref<1x1x16xf32, #tpu.memory_space<vmem>>, %arg7: memref<1x128x8xf32, #tpu.memory_space<vmem>>, %arg8: memref<1x128x8xf32, #tpu.memory_space<vmem>>) attributes {dimension_semantics = [#tpu.dimension_semantics<parallel>, #tpu.dimension_semantics<parallel>], iteration_bounds = array<i64: 2, 2>, scalar_prefetch = 0 : i64, scratch_operands = 0 : i64, tpu.core_type = #tpu.core_type<tc>, window_params = [{transform_indices = @transform_0, window_bounds = array<i64: 1, 128, 16>}, {pipeline_mode = #tpu.pipeline_mode<synchronous>, transform_indices = @transform_1, window_bounds = array<i64: 16, 8>}, {pipeline_mode = #tpu.pipeline_mode<synchronous>, transform_indices = @transform_2, window_bounds = array<i64: 1, 8>}, {pipeline_mode = #tpu.pipeline_mode<synchronous>, transform_indices = @transform_3, window_bounds = array<i64: 1, 8>}, {transform_indices = @transform_4, window_bounds = array<i64: 1, 1, 16>}, {transform_indices = @transform_5, window_bounds = array<i64: 1, 128, 8>}, {transform_indices = @transform_6, window_bounds = array<i64: 1, 128, 8>}]} {
    %c0 = arith.constant 0 : index
    %c0_0 = arith.constant 0 : index
    %c0_1 = arith.constant 0 : index
    %0 = vector.load %arg2[%c0, %c0_0, %c0_1] : memref<1x128x16xf32, #tpu.memory_space<vmem>>, vector<1x128x16xf32>
    %1 = vector.shape_cast %0 : vector<1x128x16xf32> to vector<128x16xf32>
    %c0_2 = arith.constant 0 : index
    %c0_3 = arith.constant 0 : index
    %c0_4 = arith.constant 0 : index
    %2 = vector.load %arg6[%c0_2, %c0_3, %c0_4] : memref<1x1x16xf32, #tpu.memory_space<vmem>>, vector<1x1x16xf32>
    %3 = vector.shape_cast %2 : vector<1x1x16xf32> to vector<16xf32>
    %4 = vector.shape_cast %3 : vector<16xf32> to vector<1x16xf32>
    %5 = vector.broadcast %4 : vector<1x16xf32> to vector<128x16xf32>
    %6 = arith.mulf %1, %5 : vector<128x16xf32>
    %c0_5 = arith.constant 0 : index
    %c0_6 = arith.constant 0 : index
    %7 = vector.load %arg3[%c0_5, %c0_6] : memref<16x8xf32, #tpu.memory_space<vmem>>, vector<16x8xf32>
    %cst = arith.constant dense<0.000000e+00> : vector<128x8xf32>
    %8 = tpu.matmul %6, %7, %cst {dimension_numbers = #tpu.dot_dimension_numbers<[1], [0], [0], [1], [0, 0, 1, 1], [], []>} : vector<128x16xf32>, vector<16x8xf32>, vector<128x8xf32> -> vector<128x8xf32>
    %c0_7 = arith.constant 0 : index
    %c0_8 = arith.constant 0 : index
    %9 = vector.load %arg4[%c0_7, %c0_8] : memref<1x8xf32, #tpu.memory_space<vmem>>, vector<1x8xf32>
    %10 = vector.shape_cast %9 : vector<1x8xf32> to vector<8xf32>
    %11 = vector.shape_cast %10 : vector<8xf32> to vector<1x8xf32>
    %12 = vector.broadcast %11 : vector<1x8xf32> to vector<128x8xf32>
    %13 = arith.mulf %8, %12 : vector<128x8xf32>
    %c0_9 = arith.constant 0 : index
    %c0_10 = arith.constant 0 : index
    %14 = vector.load %arg5[%c0_9, %c0_10] : memref<1x8xf32, #tpu.memory_space<vmem>>, vector<1x8xf32>
    %15 = vector.shape_cast %14 : vector<1x8xf32> to vector<8xf32>
    %16 = vector.shape_cast %15 : vector<8xf32> to vector<1x8xf32>
    %17 = vector.broadcast %16 : vector<1x8xf32> to vector<128x8xf32>
    %18 = arith.addf %13, %17 : vector<128x8xf32>
    %c0_11 = arith.constant 0 : index
    %c0_12 = arith.constant 0 : index
    %c0_13 = arith.constant 0 : index
    %19 = vector.load %arg7[%c0_11, %c0_12, %c0_13] : memref<1x128x8xf32, #tpu.memory_space<vmem>>, vector<1x128x8xf32>
    %20 = vector.shape_cast %19 : vector<1x128x8xf32> to vector<128x8xf32>
    %21 = arith.addf %18, %20 : vector<128x8xf32>
    %c0_14 = arith.constant 0 : index
    %c0_15 = arith.constant 0 : index
    %c0_16 = arith.constant 0 : index
    %22 = vector.load %arg8[%c0_14, %c0_15, %c0_16] : memref<1x128x8xf32, #tpu.memory_space<vmem>>, vector<1x128x8xf32>
    %23 = vector.shape_cast %22 : vector<1x128x8xf32> to vector<128x8xf32>
    %24 = vector.shape_cast %21 : vector<128x8xf32> to vector<1x128x8xf32>
    tpu.vector_store %arg8[%c0_14, %c0_15, %c0_16], %24 {strides = array<i32>} : memref<1x128x8xf32, #tpu.memory_space<vmem>>, vector<1x128x8xf32>,
    return
  }
  func.func @transform_0(%arg0: i32, %arg1: i32) -> (i32, i32, i32) {
    %c0_i32 = arith.constant 0 : i32
    %c0_i32_0 = arith.constant 0 : i32
    return %arg0, %arg1, %c0_i32 : i32, i32, i32
  }
  func.func @transform_1(%arg0: i32, %arg1: i32) -> (i32, i32) {
    %c0_i32 = arith.constant 0 : i32
    %c0_i32_0 = arith.constant 0 : i32
    %c0_i32_1 = arith.constant 0 : i32
    return %c0_i32, %c0_i32_0 : i32, i32
  }
  func.func @transform_2(%arg0: i32, %arg1: i32) -> (i32, i32) {
    %c0_i32 = arith.constant 0 : i32
    %c0_i32_0 = arith.constant 0 : i32
    %c0_i32_1 = arith.constant 0 : i32
    return %c0_i32, %c0_i32_0 : i32, i32
  }
  func.func @transform_3(%arg0: i32, %arg1: i32) -> (i32, i32) {
    %c0_i32 = arith.constant 0 : i32
    %c0_i32_0 = arith.constant 0 : i32
    %c0_i32_1 = arith.constant 0 : i32
    return %c0_i32, %c0_i32_0 : i32, i32
  }
  func.func @transform_4(%arg0: i32, %arg1: i32) -> (i32, i32, i32) {
    %c0_i32 = arith.constant 0 : i32
    %c0_i32_0 = arith.constant 0 : i32
    %c0_i32_1 = arith.constant 0 : i32
    return %arg0, %c0_i32, %c0_i32_0 : i32, i32, i32
  }
  func.func @transform_5(%arg0: i32, %arg1: i32) -> (i32, i32, i32) {
    %c0_i32 = arith.constant 0 : i32
    %c0_i32_0 = arith.constant 0 : i32
    return %arg0, %arg1, %c0_i32 : i32, i32, i32
  }
  func.func @transform_6(%arg0: i32, %arg1: i32) -> (i32, i32, i32) {
    %c0_i32 = arith.constant 0 : i32
    %c0_i32_0 = arith.constant 0 : i32
    return %arg0, %arg1, %c0_i32 : i32, i32, i32
  }
}

</mosaic_0001>

<llo_original>
// kernel: residual_unit_forward.3
$region0: #{residual_unit_forward.3}
  #allocation0 [shape = 'u32[]', space=smem, size = 0x4, offset = 0x4, fixed_abs, tag = 'smem constant byte address 0x4 - core index']
  #allocation1 [shape = 'u32[72,128]{1,0:T(1,128)}', space=vmem, size = 0x9000, scoped, tag = 'internal scratch']
  %s0 = inlined_call_operand.vmem [shape: f32[2,256,16], index: 0, kind: input, shape index: {}]
  %s1 = inlined_call_operand.vmem [shape: f32[16,8], index: 1, kind: input, shape index: {}]
  %s2 = inlined_call_operand.vmem [shape: f32[1,8], index: 2, kind: input, shape index: {}]
  %s3 = inlined_call_operand.vmem [shape: f32[1,8], index: 3, kind: input, shape index: {}]
  %s4 = inlined_call_operand.vmem [shape: f32[2,1,16], index: 4, kind: input, shape index: {}]
  %s5 = inlined_call_operand.vmem [shape: f32[2,256,8], index: 5, kind: input, shape index: {}]
  %s6 = inlined_call_operand.vmem [shape: f32[2,256,8], index: 6, kind: output, shape index: {}]
  %s7 = sld [smem:[#allocation0]]
  $region57: #{residual_unit_forward.3} parent=0
    _
  %s9 = ssub.s32 1, %s7
  %s10 = scalar_select 0, %s9, %s7
  loop: start=0, step=1, limit=6
  $region2: #{residual_unit_forward.3} parent=0 // loop_pre_header
    _
  $region3: #{residual_unit_forward.3} parent=0 // loop_header
    %s12 = sphi 0, %s16
    %p13 = scmp.ge.s32.totalorder %s12, 6
    %s19 = sphi 0, %s31
    %s20 = sphi 0, %s27
    %s21 = sphi 0, %s19
    %s22 = sphi 0, %s20
    %s23 = sphi 0, %s21
    %s24 = sphi 0, %s22
    %s36 = sphi 0, %s38
    %s39 = sphi 0, %s36
    %s40 = sphi 0, %s39
    %s56 = sphi 0, %s40
    %s60 = sphi 0, %s60
    %s62 = sphi 0, %s60
    %s63 = sphi 0, %s62
    %s77 = sphi 0, %s63
    %s81 = sphi 0, %s81
    %s83 = sphi 0, %s81
    %s84 = sphi 0, %s83
    %s98 = sphi 0, %s84
    %s102 = sphi 0, %s102
    %s104 = sphi 0, %s102
    %s105 = sphi 0, %s104
    %s119 = sphi 0, %s105
    %s125 = sphi 0, %s127
    %s128 = sphi 0, %s125
    %s129 = sphi 0, %s128
    %s145 = sphi 0, %s129
    %s153 = sphi 0, %s155
    %s156 = sphi 0, %s153
    %s157 = sphi 0, %s156
    %s173 = sphi 0, %s157
    %s181 = sphi 0, %s183
    %s184 = sphi 0, %s181
    %s185 = sphi 0, %s184
    %s201 = sphi 0, %s185
  $region4: #{residual_unit_forward.3} parent=0 // loop_header_branch
    %15 = sbr.rel (%p13) target = $region8
  $region5: #{residual_unit_forward.3} parent=0 // loop_body
    %s17 = ssub.s32 %s12, 1
    %s18 = ssub.s32 %s12, 2
    %s25 = sadd.s32 1, %s20
    %p26 = scmp.ge.s32.totalorder %s25, 2
    %s27 = scalar_select %p26, 0, %s25
    %s28 = sadd.s32 1, %s19
    %s29 = scalar_select %p26, %s28, %s19
    %p30 = scmp.ge.s32.totalorder %s29, 2
    %s31 = scalar_select %p30, 0, %s29
    %s32 = ssub.s32 %s19, %s31
    %s33 = ssub.s32 %s20, %s27
    %s34 = sor.u32 %s32, %s33
    %p35 = scmp.eq.s32.totalorder %s34, 0
    %s37 = sadd.s32 %s36, 1
    %s38 = scalar_select %p35, %s36, %s37
    %p41 = pneg %p35
    %p42 = scmp.eq.s32.totalorder %s12, 3
    %p43 = por %p41, %p42
    %p44 = scmp.ne.s32.totalorder %s36, %s39
    %p45 = scmp.eq.s32.totalorder %s12, 0
    %p46 = por %p44, %p45
    %p47 = scmp.ne.s32.totalorder %s36, %s39
    %p48 = scmp.eq.s32.totalorder %s17, 3
    %p49 = por %p47, %p48
    %p50 = scmp.ne.s32.totalorder %s39, %s40
    %p51 = scmp.eq.s32.totalorder %s17, 0
    %p52 = por %p50, %p51
    %p53 = scmp.ne.s32.totalorder %s39, %s40
    %p54 = scmp.eq.s32.totalorder %s18, 3
    %p55 = por %p53, %p54
    %p57 = scmp.ne.s32.totalorder %s40, %s56
    %p58 = scmp.eq.s32.totalorder %s18, 0
    %p59 = por %p57, %p58
    %s61 = sadd.s32 %s60, 1
    %p64 = scmp.eq.s32.totalorder %s12, 3
    %p65 = scmp.ne.s32.totalorder %s60, %s62
    %p66 = scmp.eq.s32.totalorder %s12, 0
    %p67 = por %p65, %p66
    %p68 = scmp.ne.s32.totalorder %s60, %s62
    %p69 = scmp.eq.s32.totalorder %s17, 3
    %p70 = por %p68, %p69
    %p71 = scmp.ne.s32.totalorder %s62, %s63
    %p72 = scmp.eq.s32.totalorder %s17, 0
    %p73 = por %p71, %p72
    %p74 = scmp.ne.s32.totalorder %s62, %s63
    %p75 = scmp.eq.s32.totalorder %s18, 3
    %p76 = por %p74, %p75
    %p78 = scmp.ne.s32.totalorder %s63, %s77
    %p79 = scmp.eq.s32.totalorder %s18, 0
    %p80 = por %p78, %p79
    %s82 = sadd.s32 %s81, 1
    %p85 = scmp.eq.s32.totalorder %s12, 3
    %p86 = scmp.ne.s32.totalorder %s81, %s83
    %p87 = scmp.eq.s32.totalorder %s12, 0
    %p88 = por %p86, %p87
    %p89 = scmp.ne.s32.totalorder %s81, %s83
    %p90 = scmp.eq.s32.totalorder %s17, 3
    %p91 = por %p89, %p90
    %p92 = scmp.ne.s32.totalorder %s83, %s84
    %p93 = scmp.eq.s32.totalorder %s17, 0
    %p94 = por %p92, %p93
    %p95 = scmp.ne.s32.totalorder %s83, %s84
    %p96 = scmp.eq.s32.totalorder %s18, 3
    %p97 = por %p95, %p96
    %p99 = scmp.ne.s32.totalorder %s84, %s98
    %p100 = scmp.eq.s32.totalorder %s18, 0
    %p101 = por %p99, %p100
    %s103 = sadd.s32 %s102, 1
    %p106 = scmp.eq.s32.totalorder %s12, 3
    %p107 = scmp.ne.s32.totalorder %s102, %s104
    %p108 = scmp.eq.s32.totalorder %s12, 0
    %p109 = por %p107, %p108
    %p110 = scmp.ne.s32.totalorder %s102, %s104
    %p111 = scmp.eq.s32.totalorder %s17, 3
    %p112 = por %p110, %p111
    %p113 = scmp.ne.s32.totalorder %s104, %s105
    %p114 = scmp.eq.s32.totalorder %s17, 0
    %p115 = por %p113, %p114
    %p116 = scmp.ne.s32.totalorder %s104, %s105
    %p117 = scmp.eq.s32.totalorder %s18, 3
    %p118 = por %p116, %p117
    %p120 = scmp.ne.s32.totalorder %s105, %s119
    %p121 = scmp.eq.s32.totalorder %s18, 0
    %p122 = por %p120, %p121
    %s123 = ssub.s32 %s19, %s31
    %p124 = scmp.eq.s32.totalorder %s123, 0
    %s126 = sadd.s32 %s125, 1
    %s127 = scalar_select %p124, %s125, %s126
    %p130 = pneg %p124
    %p131 = scmp.eq.s32.totalorder %s12, 3
    %p132 = por %p130, %p131
    %p133 = scmp.ne.s32.totalorder %s125, %s128
    %p134 = scmp.eq.s32.totalorder %s12, 0
    %p135 = por %p133, %p134
    %p136 = scmp.ne.s32.totalorder %s125, %s128
    %p137 = scmp.eq.s32.totalorder %s17, 3
    %p138 = por %p136, %p137
    %p139 = scmp.ne.s32.totalorder %s128, %s129
    %p140 = scmp.eq.s32.totalorder %s17, 0
    %p141 = por %p139, %p140
    %p142 = scmp.ne.s32.totalorder %s128, %s129
    %p143 = scmp.eq.s32.totalorder %s18, 3
    %p144 = por %p142, %p143
    %p146 = scmp.ne.s32.totalorder %s129, %s145
    %p147 = scmp.eq.s32.totalorder %s18, 0
    %p148 = por %p146, %p147
    %s149 = ssub.s32 %s19, %s31
    %s150 = ssub.s32 %s20, %s27
    %s151 = sor.u32 %s149, %s150
    %p152 = scmp.eq.s32.totalorder %s151, 0
    %s154 = sadd.s32 %s153, 1
    %s155 = scalar_select %p152, %s153, %s154
    %p158 = pneg %p152
    %p159 = scmp.eq.s32.totalorder %s12, 3
    %p160 = por %p158, %p159
    %p161 = scmp.ne.s32.totalorder %s153, %s156
    %p162 = scmp.eq.s32.totalorder %s12, 0
    %p163 = por %p161, %p162
    %p164 = scmp.ne.s32.totalorder %s153, %s156
    %p165 = scmp.eq.s32.totalorder %s17, 3
    %p166 = por %p164, %p165
    %p167 = scmp.ne.s32.totalorder %s156, %s157
    %p168 = scmp.eq.s32.totalorder %s17, 0
    %p169 = por %p167, %p168
    %p170 = scmp.ne.s32.totalorder %s156, %s157
    %p171 = scmp.eq.s32.totalorder %s18, 3
    %p172 = por %p170, %p171
    %p174 = scmp.ne.s32.totalorder %s157, %s173
    %p175 = scmp.eq.s32.totalorder %s18, 0
    %p176 = por %p174, %p175
    %s177 = ssub.s32 %s19, %s31
    %s178 = ssub.s32 %s20, %s27
    %s179 = sor.u32 %s177, %s178
    %p180 = scmp.eq.s32.totalorder %s179, 0
    %s182 = sadd.s32 %s181, 1
    %s183 = scalar_select %p180, %s181, %s182
    %p186 = pneg %p180
    %p187 = scmp.eq.s32.totalorder %s12, 3
    %p188 = por %p186, %p187
    %p189 = scmp.ne.s32.totalorder %s181, %s184
    %p190 = scmp.eq.s32.totalorder %s12, 0
    %p191 = por %p189, %p190
    %p192 = scmp.ne.s32.totalorder %s181, %s184
    %p193 = scmp.eq.s32.totalorder %s17, 3
    %p194 = por %p192, %p193
    %p195 = scmp.ne.s32.totalorder %s184, %s185
    %p196 = scmp.eq.s32.totalorder %s17, 0
    %p197 = por %p195, %p196
    %p198 = scmp.ne.s32.totalorder %s184, %s185
    %p199 = scmp.eq.s32.totalorder %s18, 3
    %p200 = por %p198, %p199
    %p202 = scmp.ne.s32.totalorder %s185, %s201
    %p203 = scmp.eq.s32.totalorder %s18, 0
    %p204 = por %p202, %p203
    %p205 = scmp.le.s32.totalorder 1, %s12
    %p206 = scmp.lt.s32.totalorder %s12, 5
    %p207 = pnand %p205, %p206
    %p208 = pneg %p207
    // Predicated region
    $region9: #{residual_unit_forward.3} parent=5 // pred_check
      _
    $region10: #{residual_unit_forward.3} parent=5 // pred_check_branch
      %210 = sbr.rel (%p207) target = $region12
    $region11: #{residual_unit_forward.3} parent=5 // pred_region
      %s211 = ssub.s32 %s12, 1
      // Predicated region
      $region13: #{residual_unit_forward.3} parent=11 // pred_check
        %p212 = pneg %p73
      $region14: #{residual_unit_forward.3} parent=11 // pred_check_branch
        %214 = sbr.rel (%p212) target = $region16
      $region15: #{residual_unit_forward.3} parent=11 // pred_region
        _
      $region16: #{residual_unit_forward.3} parent=11 // pred_fallthru
        _
      // Predicated region
      $region17: #{residual_unit_forward.3} parent=11 // pred_check
        %p215 = pneg %p94
      $region18: #{residual_unit_forward.3} parent=11 // pred_check_branch
        %217 = sbr.rel (%p215) target = $region20
      $region19: #{residual_unit_forward.3} parent=11 // pred_region
        _
      $region20: #{residual_unit_forward.3} parent=11 // pred_fallthru
        _
      // Predicated region
      $region21: #{residual_unit_forward.3} parent=11 // pred_check
        %p218 = pneg %p115
      $region22: #{residual_unit_forward.3} parent=11 // pred_check_branch
        %220 = sbr.rel (%p218) target = $region24
      $region23: #{residual_unit_forward.3} parent=11 // pred_region
        _
      $region24: #{residual_unit_forward.3} parent=11 // pred_fallthru
        _
    $region12: #{residual_unit_forward.3} parent=5 // pred_fallthru
      _
    %p221 = scmp.lt.s32.totalorder %s12, 4
    // Predicated region
    $region25: #{residual_unit_forward.3} parent=5 // pred_check
      %p222 = pneg %p221
    $region26: #{residual_unit_forward.3} parent=5 // pred_check_branch
      %224 = sbr.rel (%p222) target = $region28
    $region27: #{residual_unit_forward.3} parent=5 // pred_region
      // Predicated region
      $region29: #{residual_unit_forward.3} parent=27 // pred_check
        %p225 = pneg %p46
      $region30: #{residual_unit_forward.3} parent=27 // pred_check_branch
        %227 = sbr.rel (%p225) target = $region32
      $region31: #{residual_unit_forward.3} parent=27 // pred_region
        %s228 = smul.u32 16, %s20
        %p229 = scmp.lt.s32.totalorder %s19, 1
        %s230 = scalar_select %p229, %s19, 1
        %p231 = scmp.lt.s32.totalorder %s228, 31
        %s232 = scalar_select %p231, %s228, 31
        %s233 = smul.addr %s230, 32
        %s234 = sadd.s32 %s232, %s233
        %s235 = smul.addr %s234, 8
        %s236 = scalar_lea.vmem %s0, %s235
        %s237 = smul.u32 16, %s20
      $region32: #{residual_unit_forward.3} parent=27 // pred_fallthru
        _
      // Predicated region
      $region33: #{residual_unit_forward.3} parent=27 // pred_check
        %p238 = pneg %p135
      $region34: #{residual_unit_forward.3} parent=27 // pred_check_branch
        %240 = sbr.rel (%p238) target = $region36
      $region35: #{residual_unit_forward.3} parent=27 // pred_region
        %p241 = scmp.lt.s32.totalorder %s19, 1
        %s242 = scalar_select %p241, %s19, 1
        %s243 = scalar_lea.vmem %s4, %s242
      $region36: #{residual_unit_forward.3} parent=27 // pred_fallthru
        _
      // Predicated region
      $region37: #{residual_unit_forward.3} parent=27 // pred_check
        %p244 = pneg %p163
      $region38: #{residual_unit_forward.3} parent=27 // pred_check_branch
        %246 = sbr.rel (%p244) target = $region40
      $region39: #{residual_unit_forward.3} parent=27 // pred_region
        %s247 = smul.u32 16, %s20
        %p248 = scmp.lt.s32.totalorder %s19, 1
        %s249 = scalar_select %p248, %s19, 1
        %p250 = scmp.lt.s32.totalorder %s247, 31
        %s251 = scalar_select %p250, %s247, 31
        %s252 = smul.addr %s249, 32
        %s253 = sadd.s32 %s251, %s252
        %s254 = smul.addr %s253, 8
        %s255 = scalar_lea.vmem %s5, %s254
        %s256 = smul.u32 16, %s20
      $region40: #{residual_unit_forward.3} parent=27 // pred_fallthru
        _
    $region28: #{residual_unit_forward.3} parent=5 // pred_fallthru
      _
    %p257 = scmp.le.s32.totalorder 1, %s12
    %p258 = scmp.lt.s32.totalorder %s12, 5
    %p259 = pnand %p257, %p258
    %p260 = pneg %p259
    // Predicated region
    $region41: #{residual_unit_forward.3} parent=5 // pred_check
      _
    $region42: #{residual_unit_forward.3} parent=5 // pred_check_branch
      %262 = sbr.rel (%p259) target = $region44
    $region43: #{residual_unit_forward.3} parent=5 // pred_region
      %s263 = ssub.s32 %s12, 1
      %s264 = smul.u32 16, %s22
      %p265 = scmp.lt.s32.totalorder %s21, 1
      %s266 = scalar_select %p265, %s21, 1
      %p267 = scmp.lt.s32.totalorder %s264, 31
      %s268 = scalar_select %p267, %s264, 31
      %s269 = smul.addr %s266, 32
      %s270 = sadd.s32 %s268, %s269
      %s271 = smul.addr %s270, 8
      %s272 = scalar_lea.vmem %s0, %s271
      %p273 = pneg %p52
      %p274 = pneg %p49
      %p275 = pneg %p73
      %p276 = pneg %p70
      %p277 = pneg %p94
      %p278 = pneg %p91
      %p279 = pneg %p115
      %p280 = pneg %p112
      %p281 = scmp.lt.s32.totalorder %s21, 1
      %s282 = scalar_select %p281, %s21, 1
      %s283 = scalar_lea.vmem %s4, %s282
      %p284 = pneg %p141
      %p285 = pneg %p138
      %s286 = smul.u32 16, %s22
      %p287 = scmp.lt.s32.totalorder %s21, 1
      %s288 = scalar_select %p287, %s21, 1
      %p289 = scmp.lt.s32.totalorder %s286, 31
      %s290 = scalar_select %p289, %s286, 31
      %s291 = smul.addr %s288, 32
      %s292 = sadd.s32 %s290, %s291
      %s293 = smul.addr %s292, 8
      %s294 = scalar_lea.vmem %s5, %s293
      %p295 = pneg %p169
      %p296 = pneg %p166
      %p297 = pneg %p197
      %p298 = pneg %p194
      %s299 = smul.u32 16, %s22
      %p300 = scmp.lt.s32.totalorder %s21, 1
      %s301 = scalar_select %p300, %s21, 1
      %p302 = scmp.lt.s32.totalorder %s299, 31
      %s303 = scalar_select %p302, %s299, 31
      %s304 = smul.addr %s301, 32
      %s305 = sadd.s32 %s303, %s304
      %s306 = smul.addr %s305, 8
      %s307 = scalar_lea.vmem %s6, %s306
      %s308 = smul.u32 16, %s22
      %p309 = scmp.lt.s32.totalorder %s21, 1
      %s310 = scalar_select %p309, %s21, 1
      %p311 = scmp.lt.s32.totalorder %s308, 31
      %s312 = scalar_select %p311, %s308, 31
      %s313 = smul.addr %s310, 32
      %s314 = sadd.s32 %s312, %s313
      %s315 = smul.addr %s314, 8
      %s316 = scalar_lea.vmem %s0, %s315
      %s317 = smul.u32 16, %s22
      %p318 = scmp.lt.s32.totalorder %s21, 1
      %s319 = scalar_select %p318, %s21, 1
      %s320 = scalar_lea.vmem %s4, %s319
      %s321 = smul.u32 16, %s22
      %p322 = scmp.lt.s32.totalorder %s21, 1
      %s323 = scalar_select %p322, %s21, 1
      %p324 = scmp.lt.s32.totalorder %s321, 31
      %s325 = scalar_select %p324, %s321, 31
      %s326 = smul.addr %s323, 32
      %s327 = sadd.s32 %s325, %s326
      %s328 = smul.addr %s327, 8
      %s329 = scalar_lea.vmem %s5, %s328
      %s330 = smul.u32 16, %s22
      %s331 = smul.u32 16, %s22
      %p332 = scmp.lt.s32.totalorder %s21, 1
      %s333 = scalar_select %p332, %s21, 1
      %p334 = scmp.lt.s32.totalorder %s331, 31
      %s335 = scalar_select %p334, %s331, 31
      %s336 = smul.addr %s333, 32
      %s337 = sadd.s32 %s335, %s336
      %s338 = smul.addr %s337, 8
      %s339 = scalar_lea.vmem %s6, %s338
      %s340 = smul.u32 16, %s22
      %v341 = vld [vmem:[%s316] sm:$0xff]
      %v342 = vld [vmem:[%s316 + $0x8] sm:$0xff]
      %v343 = vld [vmem:[%s316 + $0x10] sm:$0xff]
      %v344 = vld [vmem:[%s316 + $0x18] sm:$0xff]
      %v345 = vld [vmem:[%s316 + $0x20] sm:$0xff]
      %v346 = vld [vmem:[%s316 + $0x28] sm:$0xff]
      %v347 = vld [vmem:[%s316 + $0x30] sm:$0xff]
      %v348 = vld [vmem:[%s316 + $0x38] sm:$0xff]
      %v349 = vld [vmem:[%s316 + $0x40] sm:$0xff]
      %v350 = vld [vmem:[%s316 + $0x48] sm:$0xff]
      %v351 = vld [vmem:[%s316 + $0x50] sm:$0xff]
      %v352 = vld [vmem:[%s316 + $0x58] sm:$0xff]
      %v353 = vld [vmem:[%s316 + $0x60] sm:$0xff]
      %v354 = vld [vmem:[%s316 + $0x68] sm:$0xff]
      %v355 = vld [vmem:[%s316 + $0x70] sm:$0xff]
      %v356 = vld [vmem:[%s316 + $0x78] sm:$0xff]
      %v357 = vld [vmem:[%s320] sm:$0x1]
      %v359 = vperm.slane %v357, 0
      %v361 = vmul.f32 %v341, %v359
      %v362 = vmul.f32 %v342, %v359
      %v363 = vmul.f32 %v343, %v359
      %v364 = vmul.f32 %v344, %v359
      %v365 = vmul.f32 %v345, %v359
      %v366 = vmul.f32 %v346, %v359
      %v367 = vmul.f32 %v347, %v359
      %v368 = vmul.f32 %v348, %v359
      %v369 = vmul.f32 %v349, %v359
      %v370 = vmul.f32 %v350, %v359
      %v371 = vmul.f32 %v351, %v359
      %v372 = vmul.f32 %v352, %v359
      %v373 = vmul.f32 %v353, %v359
      %v374 = vmul.f32 %v354, %v359
      %v375 = vmul.f32 %v355, %v359
      %v376 = vmul.f32 %v356, %v359
      %v377 = vld [vmem:[%s1] sm:$0xff]
      %v378 = vld [vmem:[%s1 + $0x8] sm:$0xff]
      %vm379 = vcmask 130048
      %v381 = vsel %vm379, %v361, 0
      %v384 = vsel %vm379, %v362, 0
      %v387 = vsel %vm379, %v363, 0
      %v390 = vsel %vm379, %v364, 0
      %v393 = vsel %vm379, %v365, 0
      %v396 = vsel %vm379, %v366, 0
      %v399 = vsel %vm379, %v367, 0
      %v402 = vsel %vm379, %v368, 0
      %v405 = vsel %vm379, %v369, 0
      %v408 = vsel %vm379, %v370, 0
      %v411 = vsel %vm379, %v371, 0
      %v414 = vsel %vm379, %v372, 0
      %v417 = vsel %vm379, %v373, 0
      %v420 = vsel %vm379, %v374, 0
      %v423 = vsel %vm379, %v375, 0
      %v426 = vsel %vm379, %v376, 0
      %428 = vmatpush.msra.mxu0 0.0
      %429 = vmatpush.msra.mxu0 0.0
      %430 = vmatpush.msra.mxu0 0.0
      %431 = vmatpush.msra.mxu0 0.0
      %432 = vmatpush.msra.mxu0 0.0
      %433 = vmatpush.msra.mxu0 0.0
      %434 = vmatpush.msra.mxu0 0.0
      %435 = vmatpush.msra.mxu0 0.0
      %436 = vmatpush.msra.mxu0 0.0
      %437 = vmatpush.msra.mxu0 0.0
      %438 = vmatpush.msra.mxu0 0.0
      %439 = vmatpush.msra.mxu0 0.0
      %440 = vmatpush.msra.mxu0 0.0
      %441 = vmatpush.msra.mxu0 0.0
      %442 = vmatpush.msra.mxu0 %v378
      %443 = vmatpush.msra.mxu0 %v377
      %444 = vmatmul.f32.gmra.mxu0 %v381
      %v445 = vpop.f32.mrf.mxu0
      %v446 = vadd.f32 0.0, %v445
      %447 = vmatmul.f32.gmra.mxu0 %v384
      %v448 = vpop.f32.mrf.mxu0
      %v449 = vadd.f32 0.0, %v448
      %450 = vmatmul.f32.gmra.mxu0 %v387
      %v451 = vpop.f32.mrf.mxu0
      %v452 = vadd.f32 0.0, %v451
      %453 = vmatmul.f32.gmra.mxu0 %v390
      %v454 = vpop.f32.mrf.mxu0
      %v455 = vadd.f32 0.0, %v454
      %456 = vmatmul.f32.gmra.mxu0 %v393
      %v457 = vpop.f32.mrf.mxu0
      %v458 = vadd.f32 0.0, %v457
      %459 = vmatmul.f32.gmra.mxu0 %v396
      %v460 = vpop.f32.mrf.mxu0
      %v461 = vadd.f32 0.0, %v460
      %462 = vmatmul.f32.gmra.mxu0 %v399
      %v463 = vpop.f32.mrf.mxu0
      %v464 = vadd.f32 0.0, %v463
      %465 = vmatmul.f32.gmra.mxu0 %v402
      %v466 = vpop.f32.mrf.mxu0
      %v467 = vadd.f32 0.0, %v466
      %468 = vmatmul.f32.gmra.mxu0 %v405
      %v469 = vpop.f32.mrf.mxu0
      %v470 = vadd.f32 0.0, %v469
      %471 = vmatmul.f32.gmra.mxu0 %v408
      %v472 = vpop.f32.mrf.mxu0
      %v473 = vadd.f32 0.0, %v472
      %474 = vmatmul.f32.gmra.mxu0 %v411
      %v475 = vpop.f32.mrf.mxu0
      %v476 = vadd.f32 0.0, %v475
      %477 = vmatmul.f32.gmra.mxu0 %v414
      %v478 = vpop.f32.mrf.mxu0
      %v479 = vadd.f32 0.0, %v478
      %480 = vmatmul.f32.gmra.mxu0 %v417
      %v481 = vpop.f32.mrf.mxu0
      %v482 = vadd.f32 0.0, %v481
      %483 = vmatmul.f32.gmra.mxu0 %v420
      %v484 = vpop.f32.mrf.mxu0
      %v485 = vadd.f32 0.0, %v484
      %486 = vmatmul.f32.gmra.mxu0 %v423
      %v487 = vpop.f32.mrf.mxu0
      %v488 = vadd.f32 0.0, %v487
      %489 = vmatmul.f32.gmra.mxu0 %v426
      %v490 = vpop.f32.mrf.mxu0
      %v491 = vadd.f32 0.0, %v490
      %492 = vdwg.mxu0
      %v493 = vld [vmem:[%s2] sm:$0x1]
      %v495 = vperm.slane %v493, 0
      %v497 = vmul.f32 %v446, %v495
      %v498 = vmul.f32 %v449, %v495
      %v499 = vmul.f32 %v452, %v495
      %v500 = vmul.f32 %v455, %v495
      %v501 = vmul.f32 %v458, %v495
      %v502 = vmul.f32 %v461, %v495
      %v503 = vmul.f32 %v464, %v495
      %v504 = vmul.f32 %v467, %v495
      %v505 = vmul.f32 %v470, %v495
      %v506 = vmul.f32 %v473, %v495
      %v507 = vmul.f32 %v476, %v495
      %v508 = vmul.f32 %v479, %v495
      %v509 = vmul.f32 %v482, %v495
      %v510 = vmul.f32 %v485, %v495
      %v511 = vmul.f32 %v488, %v495
      %v512 = vmul.f32 %v491, %v495
      %v513 = vld [vmem:[%s3] sm:$0x1]
      %v515 = vperm.slane %v513, 0
      %v517 = vadd.f32 %v497, %v515
      %v518 = vadd.f32 %v498, %v515
      %v519 = vadd.f32 %v499, %v515
      %v520 = vadd.f32 %v500, %v515
      %v521 = vadd.f32 %v501, %v515
      %v522 = vadd.f32 %v502, %v515
      %v523 = vadd.f32 %v503, %v515
      %v524 = vadd.f32 %v504, %v515
      %v525 = vadd.f32 %v505, %v515
      %v526 = vadd.f32 %v506, %v515
      %v527 = vadd.f32 %v507, %v515
      %v528 = vadd.f32 %v508, %v515
      %v529 = vadd.f32 %v509, %v515
      %v530 = vadd.f32 %v510, %v515
      %v531 = vadd.f32 %v511, %v515
      %v532 = vadd.f32 %v512, %v515
      %v533 = vld [vmem:[%s329] sm:$0xff]
      %v534 = vld [vmem:[%s329 + $0x8] sm:$0xff]
      %v535 = vld [vmem:[%s329 + $0x10] sm:$0xff]
      %v536 = vld [vmem:[%s329 + $0x18] sm:$0xff]
      %v537 = vld [vmem:[%s329 + $0x20] sm:$0xff]
      %v538 = vld [vmem:[%s329 + $0x28] sm:$0xff]
      %v539 = vld [vmem:[%s329 + $0x30] sm:$0xff]
      %v540 = vld [vmem:[%s329 + $0x38] sm:$0xff]
      %v541 = vld [vmem:[%s329 + $0x40] sm:$0xff]
      %v542 = vld [vmem:[%s329 + $0x48] sm:$0xff]
      %v543 = vld [vmem:[%s329 + $0x50] sm:$0xff]
      %v544 = vld [vmem:[%s329 + $0x58] sm:$0xff]
      %v545 = vld [vmem:[%s329 + $0x60] sm:$0xff]
      %v546 = vld [vmem:[%s329 + $0x68] sm:$0xff]
      %v547 = vld [vmem:[%s329 + $0x70] sm:$0xff]
      %v548 = vld [vmem:[%s329 + $0x78] sm:$0xff]
      %v549 = vadd.f32 %v517, %v533
      %v550 = vadd.f32 %v518, %v534
      %v551 = vadd.f32 %v519, %v535
      %v552 = vadd.f32 %v520, %v536
      %v553 = vadd.f32 %v521, %v537
      %v554 = vadd.f32 %v522, %v538
      %v555 = vadd.f32 %v523, %v539
      %v556 = vadd.f32 %v524, %v540
      %v557 = vadd.f32 %v525, %v541
      %v558 = vadd.f32 %v526, %v542
      %v559 = vadd.f32 %v527, %v543
      %v560 = vadd.f32 %v528, %v544
      %v561 = vadd.f32 %v529, %v545
      %v562 = vadd.f32 %v530, %v546
      %v563 = vadd.f32 %v531, %v547
      %v564 = vadd.f32 %v532, %v548
      %vm565 = vcmask 64512
      %566 = vst.msk [vmem:[%s339] sm:$0xff] %vm565, %v549
      %567 = vst.msk [vmem:[%s339 + $0x8] sm:$0xff] %vm565, %v550
      %568 = vst.msk [vmem:[%s339 + $0x10] sm:$0xff] %vm565, %v551
      %569 = vst.msk [vmem:[%s339 + $0x18] sm:$0xff] %vm565, %v552
      %570 = vst.msk [vmem:[%s339 + $0x20] sm:$0xff] %vm565, %v553
      %571 = vst.msk [vmem:[%s339 + $0x28] sm:$0xff] %vm565, %v554
      %572 = vst.msk [vmem:[%s339 + $0x30] sm:$0xff] %vm565, %v555
      %573 = vst.msk [vmem:[%s339 + $0x38] sm:$0xff] %vm565, %v556
      %574 = vst.msk [vmem:[%s339 + $0x40] sm:$0xff] %vm565, %v557
      %575 = vst.msk [vmem:[%s339 + $0x48] sm:$0xff] %vm565, %v558
      %576 = vst.msk [vmem:[%s339 + $0x50] sm:$0xff] %vm565, %v559
      %577 = vst.msk [vmem:[%s339 + $0x58] sm:$0xff] %vm565, %v560
      %578 = vst.msk [vmem:[%s339 + $0x60] sm:$0xff] %vm565, %v561
      %579 = vst.msk [vmem:[%s339 + $0x68] sm:$0xff] %vm565, %v562
      %580 = vst.msk [vmem:[%s339 + $0x70] sm:$0xff] %vm565, %v563
      %581 = vst.msk [vmem:[%s339 + $0x78] sm:$0xff] %vm565, %v564
      %s582 = smul.u32 16, %s22
      %p583 = scmp.lt.s32.totalorder %s21, 1
      %s584 = scalar_select %p583, %s21, 1
      %p585 = scmp.lt.s32.totalorder %s582, 31
      %s586 = scalar_select %p585, %s582, 31
      %s587 = smul.addr %s584, 32
      %s588 = sadd.s32 %s586, %s587
      %s589 = smul.addr %s588, 8
      %s590 = scalar_lea.vmem %s6, %s589
      // Predicated region
      $region45: #{residual_unit_forward.3} parent=43 // pred_check
        %p591 = pneg %p194
      $region46: #{residual_unit_forward.3} parent=43 // pred_check_branch
        %593 = sbr.rel (%p591) target = $region48
      $region47: #{residual_unit_forward.3} parent=43 // pred_region
        %s594 = smul.u32 16, %s22
      $region48: #{residual_unit_forward.3} parent=43 // pred_fallthru
        _
    $region44: #{residual_unit_forward.3} parent=5 // pred_fallthru
      _
    %p595 = scmp.le.s32.totalorder 2, %s12
    // Predicated region
    $region49: #{residual_unit_forward.3} parent=5 // pred_check
      %p596 = pneg %p595
    $region50: #{residual_unit_forward.3} parent=5 // pred_check_branch
      %598 = sbr.rel (%p596) target = $region52
    $region51: #{residual_unit_forward.3} parent=5 // pred_region
      %s599 = ssub.s32 %s12, 2
      // Predicated region
      $region53: #{residual_unit_forward.3} parent=51 // pred_check
        %p600 = pneg %p200
      $region54: #{residual_unit_forward.3} parent=51 // pred_check_branch
        %602 = sbr.rel (%p600) target = $region56
      $region55: #{residual_unit_forward.3} parent=51 // pred_region
        %s603 = smul.u32 16, %s24
        %p604 = scmp.lt.s32.totalorder %s23, 1
        %s605 = scalar_select %p604, %s23, 1
        %p606 = scmp.lt.s32.totalorder %s603, 31
        %s607 = scalar_select %p606, %s603, 31
        %s608 = smul.addr %s605, 32
        %s609 = sadd.s32 %s607, %s608
        %s610 = smul.addr %s609, 8
        %s611 = scalar_lea.vmem %s6, %s610
      $region56: #{residual_unit_forward.3} parent=51 // pred_fallthru
        _
    $region52: #{residual_unit_forward.3} parent=5 // pred_fallthru
      _
  $region6: #{residual_unit_forward.3} parent=0 // loop_footer
    %s16 = sadd.s32 1, %s12
  $region7: #{residual_unit_forward.3} parent=0 // loop_footer_branch
    %11 = sbr.rel target = $region3
  $region8: #{residual_unit_forward.3} parent=0 // loop_exit
    _

// kernel: residual_unit_forward.2
$region0: #{residual_unit_forward.2}
  #allocation0 [shape = 'u32[]', space=smem, size = 0x4, offset = 0x4, fixed_abs, tag = 'smem constant byte address 0x4 - core index']
  #allocation1 [shape = 'u32[72,128]{1,0:T(1,128)}', space=vmem, size = 0x9000, scoped, tag = 'internal scratch']
  #allocation2 [shape = 'f32[12,18,16]{2,1,0:T(8,128)}', space=vmem, size = 0x24000, scoped, tag = 'scratch operand']
  #allocation3 [shape = 'f32[1,16]{1,0:T(1,128)}', space=vmem, size = 0x200, scoped, tag = 'scratch operand']
  %s0 = inlined_call_operand.vmem [shape: f32[2,16,16,8], index: 0, kind: input, shape index: {}]
  %s1 = inlined_call_operand.vmem [shape: f32[8,16], index: 1, kind: input, shape index: {}]
  %s2 = inlined_call_operand.vmem [shape: f32[1,16], index: 2, kind: input, shape index: {}]
  %s3 = inlined_call_operand.vmem [shape: f32[1,16], index: 3, kind: input, shape index: {}]
  %s4 = inlined_call_operand.vmem [shape: f32[9,16], index: 4, kind: input, shape index: {}]
  %s5 = inlined_call_operand.vmem [shape: f32[1,16], index: 5, kind: input, shape index: {}]
  %s6 = inlined_call_operand.vmem [shape: f32[1,16], index: 6, kind: input, shape index: {}]
  %s7 = inlined_call_operand.vmem [shape: f32[2,16,16,16], index: 7, kind: output, shape index: {0}]
  %s8 = inlined_call_operand.vmem [shape: f32[2,1,16], index: 8, kind: output, shape index: {1}]
  %9 = xla_tuple %s7, %s8
  %s10 = sld [smem:[#allocation0]]
  $region77: #{residual_unit_forward.2} parent=0
    _
  %s12 = ssub.s32 1, %s10
  %s13 = scalar_select 0, %s12, %s10
  loop: start=0, step=1, limit=6
  $region2: #{residual_unit_forward.2} parent=0 // loop_pre_header
    _
  $region3: #{residual_unit_forward.2} parent=0 // loop_header
    %s15 = sphi 0, %s19
    %p16 = scmp.ge.s32.totalorder %s15, 6
    %s22 = sphi 0, %s34
    %s23 = sphi 0, %s30
    %s24 = sphi 0, %s22
    %s25 = sphi 0, %s23
    %s26 = sphi 0, %s24
    %s27 = sphi 0, %s25
    %s37 = sphi 0, %s39
    %s40 = sphi 0, %s37
    %s41 = sphi 0, %s40
    %s57 = sphi 0, %s41
    %s61 = sphi 0, %s61
    %s63 = sphi 0, %s61
    %s64 = sphi 0, %s63
    %s78 = sphi 0, %s64
    %s82 = sphi 0, %s82
    %s84 = sphi 0, %s82
    %s85 = sphi 0, %s84
    %s99 = sphi 0, %s85
    %s103 = sphi 0, %s103
    %s105 = sphi 0, %s103
    %s106 = sphi 0, %s105
    %s120 = sphi 0, %s106
    %s124 = sphi 0, %s124
    %s126 = sphi 0, %s124
    %s127 = sphi 0, %s126
    %s141 = sphi 0, %s127
    %s145 = sphi 0, %s145
    %s147 = sphi 0, %s145
    %s148 = sphi 0, %s147
    %s162 = sphi 0, %s148
    %s166 = sphi 0, %s166
    %s168 = sphi 0, %s166
    %s169 = sphi 0, %s168
    %s183 = sphi 0, %s169
    %s191 = sphi 0, %s193
    %s194 = sphi 0, %s191
    %s195 = sphi 0, %s194
    %s211 = sphi 0, %s195
    %s217 = sphi 0, %s219
    %s220 = sphi 0, %s217
    %s221 = sphi 0, %s220
    %s237 = sphi 0, %s221
  $region4: #{residual_unit_forward.2} parent=0 // loop_header_branch
    %18 = sbr.rel (%p16) target = $region8
  $region5: #{residual_unit_forward.2} parent=0 // loop_body
    %s20 = ssub.s32 %s15, 1
    %s21 = ssub.s32 %s15, 2
    %s28 = sadd.s32 1, %s23
    %p29 = scmp.ge.s32.totalorder %s28, 2
    %s30 = scalar_select %p29, 0, %s28
    %s31 = sadd.s32 1, %s22
    %s32 = scalar_select %p29, %s31, %s22
    %p33 = scmp.ge.s32.totalorder %s32, 2
    %s34 = scalar_select %p33, 0, %s32
    %s35 = ssub.s32 %s22, %s34
    %p36 = scmp.eq.s32.totalorder %s35, 0
    %s38 = sadd.s32 %s37, 1
    %s39 = scalar_select %p36, %s37, %s38
    %p42 = pneg %p36
    %p43 = scmp.eq.s32.totalorder %s15, 3
    %p44 = por %p42, %p43
    %p45 = scmp.ne.s32.totalorder %s37, %s40
    %p46 = scmp.eq.s32.totalorder %s15, 0
    %p47 = por %p45, %p46
    %p48 = scmp.ne.s32.totalorder %s37, %s40
    %p49 = scmp.eq.s32.totalorder %s20, 3
    %p50 = por %p48, %p49
    %p51 = scmp.ne.s32.totalorder %s40, %s41
    %p52 = scmp.eq.s32.totalorder %s20, 0
    %p53 = por %p51, %p52
    %p54 = scmp.ne.s32.totalorder %s40, %s41
    %p55 = scmp.eq.s32.totalorder %s21, 3
    %p56 = por %p54, %p55
    %p58 = scmp.ne.s32.totalorder %s41, %s57
    %p59 = scmp.eq.s32.totalorder %s21, 0
    %p60 = por %p58, %p59
    %s62 = sadd.s32 %s61, 1
    %p65 = scmp.eq.s32.totalorder %s15, 3
    %p66 = scmp.ne.s32.totalorder %s61, %s63
    %p67 = scmp.eq.s32.totalorder %s15, 0
    %p68 = por %p66, %p67
    %p69 = scmp.ne.s32.totalorder %s61, %s63
    %p70 = scmp.eq.s32.totalorder %s20, 3
    %p71 = por %p69, %p70
    %p72 = scmp.ne.s32.totalorder %s63, %s64
    %p73 = scmp.eq.s32.totalorder %s20, 0
    %p74 = por %p72, %p73
    %p75 = scmp.ne.s32.totalorder %s63, %s64
    %p76 = scmp.eq.s32.totalorder %s21, 3
    %p77 = por %p75, %p76
    %p79 = scmp.ne.s32.totalorder %s64, %s78
    %p80 = scmp.eq.s32.totalorder %s21, 0
    %p81 = por %p79, %p80
    %s83 = sadd.s32 %s82, 1
    %p86 = scmp.eq.s32.totalorder %s15, 3
    %p87 = scmp.ne.s32.totalorder %s82, %s84
    %p88 = scmp.eq.s32.totalorder %s15, 0
    %p89 = por %p87, %p88
    %p90 = scmp.ne.s32.totalorder %s82, %s84
    %p91 = scmp.eq.s32.totalorder %s20, 3
    %p92 = por %p90, %p91
    %p93 = scmp.ne.s32.totalorder %s84, %s85
    %p94 = scmp.eq.s32.totalorder %s20, 0
    %p95 = por %p93, %p94
    %p96 = scmp.ne.s32.totalorder %s84, %s85
    %p97 = scmp.eq.s32.totalorder %s21, 3
    %p98 = por %p96, %p97
    %p100 = scmp.ne.s32.totalorder %s85, %s99
    %p101 = scmp.eq.s32.totalorder %s21, 0
    %p102 = por %p100, %p101
    %s104 = sadd.s32 %s103, 1
    %p107 = scmp.eq.s32.totalorder %s15, 3
    %p108 = scmp.ne.s32.totalorder %s103, %s105
    %p109 = scmp.eq.s32.totalorder %s15, 0
    %p110 = por %p108, %p109
    %p111 = scmp.ne.s32.totalorder %s103, %s105
    %p112 = scmp.eq.s32.totalorder %s20, 3
    %p113 = por %p111, %p112
    %p114 = scmp.ne.s32.totalorder %s105, %s106
    %p115 = scmp.eq.s32.totalorder %s20, 0
    %p116 = por %p114, %p115
    %p117 = scmp.ne.s32.totalorder %s105, %s106
    %p118 = scmp.eq.s32.totalorder %s21, 3
    %p119 = por %p117, %p118
    %p121 = scmp.ne.s32.totalorder %s106, %s120
    %p122 = scmp.eq.s32.totalorder %s21, 0
    %p123 = por %p121, %p122
    %s125 = sadd.s32 %s124, 1
    %p128 = scmp.eq.s32.totalorder %s15, 3
    %p129 = scmp.ne.s32.totalorder %s124, %s126
    %p130 = scmp.eq.s32.totalorder %s15, 0
    %p131 = por %p129, %p130
    %p132 = scmp.ne.s32.totalorder %s124, %s126
    %p133 = scmp.eq.s32.totalorder %s20, 3
    %p134 = por %p132, %p133
    %p135 = scmp.ne.s32.totalorder %s126, %s127
    %p136 = scmp.eq.s32.totalorder %s20, 0
    %p137 = por %p135, %p136
    %p138 = scmp.ne.s32.totalorder %s126, %s127
    %p139 = scmp.eq.s32.totalorder %s21, 3
    %p140 = por %p138, %p139
    %p142 = scmp.ne.s32.totalorder %s127, %s141
    %p143 = scmp.eq.s32.totalorder %s21, 0
    %p144 = por %p142, %p143
    %s146 = sadd.s32 %s145, 1
    %p149 = scmp.eq.s32.totalorder %s15, 3
    %p150 = scmp.ne.s32.totalorder %s145, %s147
    %p151 = scmp.eq.s32.totalorder %s15, 0
    %p152 = por %p150, %p151
    %p153 = scmp.ne.s32.totalorder %s145, %s147
    %p154 = scmp.eq.s32.totalorder %s20, 3
    %p155 = por %p153, %p154
    %p156 = scmp.ne.s32.totalorder %s147, %s148
    %p157 = scmp.eq.s32.totalorder %s20, 0
    %p158 = por %p156, %p157
    %p159 = scmp.ne.s32.totalorder %s147, %s148
    %p160 = scmp.eq.s32.totalorder %s21, 3
    %p161 = por %p159, %p160
    %p163 = scmp.ne.s32.totalorder %s148, %s162
    %p164 = scmp.eq.s32.totalorder %s21, 0
    %p165 = por %p163, %p164
    %s167 = sadd.s32 %s166, 1
    %p170 = scmp.eq.s32.totalorder %s15, 3
    %p171 = scmp.ne.s32.totalorder %s166, %s168
    %p172 = scmp.eq.s32.totalorder %s15, 0
    %p173 = por %p171, %p172
    %p174 = scmp.ne.s32.totalorder %s166, %s168
    %p175 = scmp.eq.s32.totalorder %s20, 3
    %p176 = por %p174, %p175
    %p177 = scmp.ne.s32.totalorder %s168, %s169
    %p178 = scmp.eq.s32.totalorder %s20, 0
    %p179 = por %p177, %p178
    %p180 = scmp.ne.s32.totalorder %s168, %s169
    %p181 = scmp.eq.s32.totalorder %s21, 3
    %p182 = por %p180, %p181
    %p184 = scmp.ne.s32.totalorder %s169, %s183
    %p185 = scmp.eq.s32.totalorder %s21, 0
    %p186 = por %p184, %p185
    %s187 = ssub.s32 %s22, %s34
    %s188 = ssub.s32 %s23, %s30
    %s189 = sor.u32 %s187, %s188
    %p190 = scmp.eq.s32.totalorder %s189, 0
    %s192 = sadd.s32 %s191, 1
    %s193 = scalar_select %p190, %s191, %s192
    %p196 = pneg %p190
    %p197 = scmp.eq.s32.totalorder %s15, 3
    %p198 = por %p196, %p197
    %p199 = scmp.ne.s32.totalorder %s191, %s194
    %p200 = scmp.eq.s32.totalorder %s15, 0
    %p201 = por %p199, %p200
    %p202 = scmp.ne.s32.totalorder %s191, %s194
    %p203 = scmp.eq.s32.totalorder %s20, 3
    %p204 = por %p202, %p203
    %p205 = scmp.ne.s32.totalorder %s194, %s195
    %p206 = scmp.eq.s32.totalorder %s20, 0
    %p207 = por %p205, %p206
    %p208 = scmp.ne.s32.totalorder %s194, %s195
    %p209 = scmp.eq.s32.totalorder %s21, 3
    %p210 = por %p208, %p209
    %p212 = scmp.ne.s32.totalorder %s195, %s211
    %p213 = scmp.eq.s32.totalorder %s21, 0
    %p214 = por %p212, %p213
    %s215 = ssub.s32 %s22, %s34
    %p216 = scmp.eq.s32.totalorder %s215, 0
    %s218 = sadd.s32 %s217, 1
    %s219 = scalar_select %p216, %s217, %s218
    %p222 = pneg %p216
    %p223 = scmp.eq.s32.totalorder %s15, 3
    %p224 = por %p222, %p223
    %p225 = scmp.ne.s32.totalorder %s217, %s220
    %p226 = scmp.eq.s32.totalorder %s15, 0
    %p227 = por %p225, %p226
    %p228 = scmp.ne.s32.totalorder %s217, %s220
    %p229 = scmp.eq.s32.totalorder %s20, 3
    %p230 = por %p228, %p229
    %p231 = scmp.ne.s32.totalorder %s220, %s221
    %p232 = scmp.eq.s32.totalorder %s20, 0
    %p233 = por %p231, %p232
    %p234 = scmp.ne.s32.totalorder %s220, %s221
    %p235 = scmp.eq.s32.totalorder %s21, 3
    %p236 = por %p234, %p235
    %p238 = scmp.ne.s32.totalorder %s221, %s237
    %p239 = scmp.eq.s32.totalorder %s21, 0
    %p240 = por %p238, %p239
    %p241 = scmp.le.s32.totalorder 1, %s15
    %p242 = scmp.lt.s32.totalorder %s15, 5
    %p243 = pnand %p241, %p242
    %p244 = pneg %p243
    // Predicated region
    $region9: #{residual_unit_forward.2} parent=5 // pred_check
      _
    $region10: #{residual_unit_forward.2} parent=5 // pred_check_branch
      %246 = sbr.rel (%p243) target = $region12
    $region11: #{residual_unit_forward.2} parent=5 // pred_region
      %s247 = ssub.s32 %s15, 1
      // Predicated region
      $region13: #{residual_unit_forward.2} parent=11 // pred_check
        %p248 = pneg %p74
      $region14: #{residual_unit_forward.2} parent=11 // pred_check_branch
        %250 = sbr.rel (%p248) target = $region16
      $region15: #{residual_unit_forward.2} parent=11 // pred_region
        _
      $region16: #{residual_unit_forward.2} parent=11 // pred_fallthru
        _
      // Predicated region
      $region17: #{residual_unit_forward.2} parent=11 // pred_check
        %p251 = pneg %p95
      $region18: #{residual_unit_forward.2} parent=11 // pred_check_branch
        %253 = sbr.rel (%p251) target = $region20
      $region19: #{residual_unit_forward.2} parent=11 // pred_region
        _
      $region20: #{residual_unit_forward.2} parent=11 // pred_fallthru
        _
      // Predicated region
      $region21: #{residual_unit_forward.2} parent=11 // pred_check
        %p254 = pneg %p116
      $region22: #{residual_unit_forward.2} parent=11 // pred_check_branch
        %256 = sbr.rel (%p254) target = $region24
      $region23: #{residual_unit_forward.2} parent=11 // pred_region
        _
      $region24: #{residual_unit_forward.2} parent=11 // pred_fallthru
        _
      // Predicated region
      $region25: #{residual_unit_forward.2} parent=11 // pred_check
        %p257 = pneg %p137
      $region26: #{residual_unit_forward.2} parent=11 // pred_check_branch
        %259 = sbr.rel (%p257) target = $region28
      $region27: #{residual_unit_forward.2} parent=11 // pred_region
        _
      $region28: #{residual_unit_forward.2} parent=11 // pred_fallthru
        _
      // Predicated region
      $region29: #{residual_unit_forward.2} parent=11 // pred_check
        %p260 = pneg %p158
      $region30: #{residual_unit_forward.2} parent=11 // pred_check_branch
        %262 = sbr.rel (%p260) target = $region32
      $region31: #{residual_unit_forward.2} parent=11 // pred_region
        _
      $region32: #{residual_unit_forward.2} parent=11 // pred_fallthru
        _
      // Predicated region
      $region33: #{residual_unit_forward.2} parent=11 // pred_check
        %p263 = pneg %p179
      $region34: #{residual_unit_forward.2} parent=11 // pred_check_branch
        %265 = sbr.rel (%p263) target = $region36
      $region35: #{residual_unit_forward.2} parent=11 // pred_region
        _
      $region36: #{residual_unit_forward.2} parent=11 // pred_fallthru
        _
    $region12: #{residual_unit_forward.2} parent=5 // pred_fallthru
      _
    %p266 = scmp.lt.s32.totalorder %s15, 4
    // Predicated region
    $region37: #{residual_unit_forward.2} parent=5 // pred_check
      %p267 = pneg %p266
    $region38: #{residual_unit_forward.2} parent=5 // pred_check_branch
      %269 = sbr.rel (%p267) target = $region40
    $region39: #{residual_unit_forward.2} parent=5 // pred_region
      // Predicated region
      $region41: #{residual_unit_forward.2} parent=39 // pred_check
        %p270 = pneg %p47
      $region42: #{residual_unit_forward.2} parent=39 // pred_check_branch
        %272 = sbr.rel (%p270) target = $region44
      $region43: #{residual_unit_forward.2} parent=39 // pred_region
        %p273 = scmp.lt.s32.totalorder %s22, 1
        %s274 = scalar_select %p273, %s22, 1
        %s275 = smul.addr %s274, 32
        %s276 = smul.addr %s275, 8
        %s277 = scalar_lea.vmem %s0, %s276
      $region44: #{residual_unit_forward.2} parent=39 // pred_fallthru
        _
    $region40: #{residual_unit_forward.2} parent=5 // pred_fallthru
      _
    %p278 = scmp.le.s32.totalorder 1, %s15
    %p279 = scmp.lt.s32.totalorder %s15, 5
    %p280 = pnand %p278, %p279
    %p281 = pneg %p280
    // Predicated region
    $region45: #{residual_unit_forward.2} parent=5 // pred_check
      _
    $region46: #{residual_unit_forward.2} parent=5 // pred_check_branch
      %283 = sbr.rel (%p280) target = $region48
    $region47: #{residual_unit_forward.2} parent=5 // pred_region
      %s284 = ssub.s32 %s15, 1
      %p285 = scmp.lt.s32.totalorder %s24, 1
      %s286 = scalar_select %p285, %s24, 1
      %s287 = smul.addr %s286, 32
      %s288 = smul.addr %s287, 8
      %s289 = scalar_lea.vmem %s0, %s288
      %p290 = pneg %p53
      %p291 = pneg %p50
      %p292 = pneg %p74
      %p293 = pneg %p71
      %p294 = pneg %p95
      %p295 = pneg %p92
      %p296 = pneg %p116
      %p297 = pneg %p113
      %p298 = pneg %p137
      %p299 = pneg %p134
      %p300 = pneg %p158
      %p301 = pneg %p155
      %p302 = pneg %p179
      %p303 = pneg %p176
      %p304 = pneg %p207
      %p305 = pneg %p204
      %s306 = smul.u32 8, %s25
      %p307 = scmp.lt.s32.totalorder %s24, 1
      %s308 = scalar_select %p307, %s24, 1
      %p309 = scmp.lt.s32.totalorder %s306, 15
      %s310 = scalar_select %p309, %s306, 15
      %s311 = smul.addr %s310, 2
      %s312 = smul.addr %s308, 32
      %s313 = sadd.s32 %s311, %s312
      %s314 = smul.addr %s313, 8
      %s315 = scalar_lea.vmem %s7, %s314
      %p316 = pneg %p233
      %p317 = pneg %p230
      %p318 = scmp.lt.s32.totalorder %s24, 1
      %s319 = scalar_select %p318, %s24, 1
      %s320 = scalar_lea.vmem %s8, %s319
      %p321 = scmp.lt.s32.totalorder %s24, 1
      %s322 = scalar_select %p321, %s24, 1
      %s323 = smul.addr %s322, 32
      %s324 = smul.addr %s323, 8
      %s325 = scalar_lea.vmem %s0, %s324
      %s326 = smul.u32 8, %s25
      %p327 = scmp.lt.s32.totalorder %s24, 1
      %s328 = scalar_select %p327, %s24, 1
      %p329 = scmp.lt.s32.totalorder %s326, 15
      %s330 = scalar_select %p329, %s326, 15
      %s331 = smul.addr %s330, 2
      %s332 = smul.addr %s328, 32
      %s333 = sadd.s32 %s331, %s332
      %s334 = smul.addr %s333, 8
      %s335 = scalar_lea.vmem %s7, %s334
      %s336 = smul.u32 8, %s25
      %p337 = scmp.lt.s32.totalorder %s24, 1
      %s338 = scalar_select %p337, %s24, 1
      %s339 = scalar_lea.vmem %s8, %s338
      %s340 = smul.u32 %s25, 8
      %s341 = ssub.s32 %s340, 1
      %p342 = scmp.gt.s32.totalorder %s341, 0
      %s343 = scalar_select %p342, %s341, 0
      %p344 = scmp.lt.s32.totalorder %s343, 6
      %s345 = scalar_select %p344, %s343, 6
      %s346 = ssub.s32 %s345, %s340
      %s347 = sadd.s32 %s346, 2
      %vm348 = vcmask 130048
      %349 = vst.msk [vmem:[#allocation2] sm:$0xff] %vm348, 0.0
      %350 = vst.msk [vmem:[#allocation2 + $0x8] sm:$0xff] %vm348, 0.0
      %vm351 = vcmask 123904
      %352 = vst.msk [vmem:[#allocation2 + $0x10] sm:$0x3] %vm351, 0.0
      %353 = vst.msk [vmem:[#allocation2 + $0x18] sm:$0xff] %vm348, 0.0
      %354 = vst.msk [vmem:[#allocation2 + $0x20] sm:$0xff] %vm348, 0.0
      %355 = vst.msk [vmem:[#allocation2 + $0x28] sm:$0x3] %vm351, 0.0
      %356 = vst.msk [vmem:[#allocation2 + $0x30] sm:$0xff] %vm348, 0.0
      %357 = vst.msk [vmem:[#allocation2 + $0x38] sm:$0xff] %vm348, 0.0
      %358 = vst.msk [vmem:[#allocation2 + $0x40] sm:$0x3] %vm351, 0.0
      %359 = vst.msk [vmem:[#allocation2 + $0x48] sm:$0xff] %vm348, 0.0
      %360 = vst.msk [vmem:[#allocation2 + $0x50] sm:$0xff] %vm348, 0.0
      %361 = vst.msk [vmem:[#allocation2 + $0x58] sm:$0x3] %vm351, 0.0
      %362 = vst.msk [vmem:[#allocation2 + $0x60] sm:$0xff] %vm348, 0.0
      %363 = vst.msk [vmem:[#allocation2 + $0x68] sm:$0xff] %vm348, 0.0
      %364 = vst.msk [vmem:[#allocation2 + $0x70] sm:$0x3] %vm351, 0.0
      %365 = vst.msk [vmem:[#allocation2 + $0x78] sm:$0xff] %vm348, 0.0
      %366 = vst.msk [vmem:[#allocation2 + $0x80] sm:$0xff] %vm348, 0.0
      %367 = vst.msk [vmem:[#allocation2 + $0x88] sm:$0x3] %vm351, 0.0
      %368 = vst.msk [vmem:[#allocation2 + $0x90] sm:$0xff] %vm348, 0.0
      %369 = vst.msk [vmem:[#allocation2 + $0x98] sm:$0xff] %vm348, 0.0
      %370 = vst.msk [vmem:[#allocation2 + $0xa0] sm:$0x3] %vm351, 0.0
      %371 = vst.msk [vmem:[#allocation2 + $0xa8] sm:$0xff] %vm348, 0.0
      %372 = vst.msk [vmem:[#allocation2 + $0xb0] sm:$0xff] %vm348, 0.0
      %373 = vst.msk [vmem:[#allocation2 + $0xb8] sm:$0x3] %vm351, 0.0
      %374 = vst.msk [vmem:[#allocation2 + $0xc0] sm:$0xff] %vm348, 0.0
      %375 = vst.msk [vmem:[#allocation2 + $0xc8] sm:$0xff] %vm348, 0.0
      %376 = vst.msk [vmem:[#allocation2 + $0xd0] sm:$0x3] %vm351, 0.0
      %377 = vst.msk [vmem:[#allocation2 + $0xd8] sm:$0xff] %vm348, 0.0
      %378 = vst.msk [vmem:[#allocation2 + $0xe0] sm:$0xff] %vm348, 0.0
      %379 = vst.msk [vmem:[#allocation2 + $0xe8] sm:$0x3] %vm351, 0.0
      %380 = vst.msk [vmem:[#allocation2 + $0xf0] sm:$0xff] %vm348, 0.0
      %381 = vst.msk [vmem:[#allocation2 + $0xf8] sm:$0xff] %vm348, 0.0
      %382 = vst.msk [vmem:[#allocation2 + $0x100] sm:$0x3] %vm351, 0.0
      %383 = vst.msk [vmem:[#allocation2 + $0x108] sm:$0xff] %vm348, 0.0
      %384 = vst.msk [vmem:[#allocation2 + $0x110] sm:$0xff] %vm348, 0.0
      %385 = vst.msk [vmem:[#allocation2 + $0x118] sm:$0x3] %vm351, 0.0
      %s386 = smul.u32 %s345, 16
      %s387 = scalar_lea.vmem %s325, %s386
      %v388 = vld [vmem:[%s387] sm:$0xff]
      %v389 = vld [vmem:[%s387 + $0x8] sm:$0xff]
      %v390 = vld [vmem:[%s387 + $0x10] sm:$0xff]
      %v391 = vld [vmem:[%s387 + $0x18] sm:$0xff]
      %v392 = vld [vmem:[%s387 + $0x20] sm:$0xff]
      %v393 = vld [vmem:[%s387 + $0x28] sm:$0xff]
      %v394 = vld [vmem:[%s387 + $0x30] sm:$0xff]
      %v395 = vld [vmem:[%s387 + $0x38] sm:$0xff]
      %v396 = vld [vmem:[%s387 + $0x40] sm:$0xff]
      %v397 = vld [vmem:[%s387 + $0x48] sm:$0xff]
      %v398 = vld [vmem:[%s387 + $0x50] sm:$0xff]
      %v399 = vld [vmem:[%s387 + $0x58] sm:$0xff]
      %v400 = vld [vmem:[%s387 + $0x60] sm:$0xff]
      %v401 = vld [vmem:[%s387 + $0x68] sm:$0xff]
      %v402 = vld [vmem:[%s387 + $0x70] sm:$0xff]
      %v403 = vld [vmem:[%s387 + $0x78] sm:$0xff]
      %v404 = vld [vmem:[%s387 + $0x80] sm:$0xff]
      %v405 = vld [vmem:[%s387 + $0x88] sm:$0xff]
      %v406 = vld [vmem:[%s387 + $0x90] sm:$0xff]
      %v407 = vld [vmem:[%s387 + $0x98] sm:$0xff]
      %v408 = vld [vmem:[%s1] sm:$0xff]
      %vm409 = vcmask 64512
      %v411 = vsel %vm409, %v388, 0
      %v414 = vsel %vm409, %v389, 0
      %v417 = vsel %vm409, %v390, 0
      %v420 = vsel %vm409, %v391, 0
      %v423 = vsel %vm409, %v392, 0
      %v426 = vsel %vm409, %v393, 0
      %v429 = vsel %vm409, %v394, 0
      %v432 = vsel %vm409, %v395, 0
      %v435 = vsel %vm409, %v396, 0
      %v438 = vsel %vm409, %v397, 0
      %v441 = vsel %vm409, %v398, 0
      %v444 = vsel %vm409, %v399, 0
      %v447 = vsel %vm409, %v400, 0
      %v450 = vsel %vm409, %v401, 0
      %v453 = vsel %vm409, %v402, 0
      %v456 = vsel %vm409, %v403, 0
      %v459 = vsel %vm409, %v404, 0
      %v462 = vsel %vm409, %v405, 0
      %v465 = vsel %vm409, %v406, 0
      %v468 = vsel %vm409, %v407, 0
      %470 = vmatpush.msra.mxu0 0.0
      %471 = vmatpush.msra.mxu0 0.0
      %472 = vmatpush.msra.mxu0 0.0
      %473 = vmatpush.msra.mxu0 0.0
      %474 = vmatpush.msra.mxu0 0.0
      %475 = vmatpush.msra.mxu0 0.0
      %476 = vmatpush.msra.mxu0 0.0
      %477 = vmatpush.msra.mxu0 0.0
      %478 = vmatpush.msra.mxu0 0.0
      %479 = vmatpush.msra.mxu0 0.0
      %480 = vmatpush.msra.mxu0 0.0
      %481 = vmatpush.msra.mxu0 0.0
      %482 = vmatpush.msra.mxu0 0.0
      %483 = vmatpush.msra.mxu0 0.0
      %484 = vmatpush.msra.mxu0 0.0
      %485 = vmatpush.msra.mxu0 %v408
      %486 = vmatmul.f32.gmra.mxu0 %v411
      %v487 = vpop.f32.mrf.mxu0
      %v488 = vadd.f32 0.0, %v487
      %489 = vmatmul.f32.gmra.mxu0 %v414
      %v490 = vpop.f32.mrf.mxu0
      %v491 = vadd.f32 0.0, %v490
      %492 = vmatmul.f32.gmra.mxu0 %v417
      %v493 = vpop.f32.mrf.mxu0
      %v494 = vadd.f32 0.0, %v493
      %495 = vmatmul.f32.gmra.mxu0 %v420
      %v496 = vpop.f32.mrf.mxu0
      %v497 = vadd.f32 0.0, %v496
      %498 = vmatmul.f32.gmra.mxu0 %v423
      %v499 = vpop.f32.mrf.mxu0
      %v500 = vadd.f32 0.0, %v499
      %501 = vmatmul.f32.gmra.mxu0 %v426
      %v502 = vpop.f32.mrf.mxu0
      %v503 = vadd.f32 0.0, %v502
      %504 = vmatmul.f32.gmra.mxu0 %v429
      %v505 = vpop.f32.mrf.mxu0
      %v506 = vadd.f32 0.0, %v505
      %507 = vmatmul.f32.gmra.mxu0 %v432
      %v508 = vpop.f32.mrf.mxu0
      %v509 = vadd.f32 0.0, %v508
      %510 = vmatmul.f32.gmra.mxu0 %v435
      %v511 = vpop.f32.mrf.mxu0
      %v512 = vadd.f32 0.0, %v511
      %513 = vmatmul.f32.gmra.mxu0 %v438
      %v514 = vpop.f32.mrf.mxu0
      %v515 = vadd.f32 0.0, %v514
      %516 = vmatmul.f32.gmra.mxu0 %v441
      %v517 = vpop.f32.mrf.mxu0
      %v518 = vadd.f32 0.0, %v517
      %519 = vmatmul.f32.gmra.mxu0 %v444
      %v520 = vpop.f32.mrf.mxu0
      %v521 = vadd.f32 0.0, %v520
      %522 = vmatmul.f32.gmra.mxu0 %v447
      %v523 = vpop.f32.mrf.mxu0
      %v524 = vadd.f32 0.0, %v523
      %525 = vmatmul.f32.gmra.mxu0 %v450
      %v526 = vpop.f32.mrf.mxu0
      %v527 = vadd.f32 0.0, %v526
      %528 = vmatmul.f32.gmra.mxu0 %v453
      %v529 = vpop.f32.mrf.mxu0
      %v530 = vadd.f32 0.0, %v529
      %531 = vmatmul.f32.gmra.mxu0 %v456
      %v532 = vpop.f32.mrf.mxu0
      %v533 = vadd.f32 0.0, %v532
      %534 = vmatmul.f32.gmra.mxu0 %v459
      %v535 = vpop.f32.mrf.mxu0
      %v536 = vadd.f32 0.0, %v535
      %537 = vmatmul.f32.gmra.mxu0 %v462
      %v538 = vpop.f32.mrf.mxu0
      %v539 = vadd.f32 0.0, %v538
      %540 = vmatmul.f32.gmra.mxu0 %v465
      %v541 = vpop.f32.mrf.mxu0
      %v542 = vadd.f32 0.0, %v541
      %543 = vmatmul.f32.gmra.mxu0 %v468
      %v544 = vpop.f32.mrf.mxu0
      %v545 = vadd.f32 0.0, %v544
      %546 = vdwg.mxu0
      %v547 = vld [vmem:[%s2] sm:$0x1]
      %v549 = vperm.slane %v547, 0
      %v551 = vmul.f32 %v488, %v549
      %v552 = vmul.f32 %v491, %v549
      %v553 = vmul.f32 %v494, %v549
      %v554 = vmul.f32 %v497, %v549
      %v555 = vmul.f32 %v500, %v549
      %v556 = vmul.f32 %v503, %v549
      %v557 = vmul.f32 %v506, %v549
      %v558 = vmul.f32 %v509, %v549
      %v559 = vmul.f32 %v512, %v549
      %v560 = vmul.f32 %v515, %v549
      %v561 = vmul.f32 %v518, %v549
      %v562 = vmul.f32 %v521, %v549
      %v563 = vmul.f32 %v524, %v549
      %v564 = vmul.f32 %v527, %v549
      %v565 = vmul.f32 %v530, %v549
      %v566 = vmul.f32 %v533, %v549
      %v567 = vmul.f32 %v536, %v549
      %v568 = vmul.f32 %v539, %v549
      %v569 = vmul.f32 %v542, %v549
      %v570 = vmul.f32 %v545, %v549
      %v571 = vld [vmem:[%s3] sm:$0x1]
      %v573 = vperm.slane %v571, 0
      %v575 = vadd.f32 %v551, %v573
      %v576 = vadd.f32 %v552, %v573
      %v577 = vadd.f32 %v553, %v573
      %v578 = vadd.f32 %v554, %v573
      %v579 = vadd.f32 %v555, %v573
      %v580 = vadd.f32 %v556, %v573
      %v581 = vadd.f32 %v557, %v573
      %v582 = vadd.f32 %v558, %v573
      %v583 = vadd.f32 %v559, %v573
      %v584 = vadd.f32 %v560, %v573
      %v585 = vadd.f32 %v561, %v573
      %v586 = vadd.f32 %v562, %v573
      %v587 = vadd.f32 %v563, %v573
      %v588 = vadd.f32 %v564, %v573
      %v589 = vadd.f32 %v565, %v573
      %v590 = vadd.f32 %v566, %v573
      %v591 = vadd.f32 %v567, %v573
      %v592 = vadd.f32 %v568, %v573
      %v593 = vadd.f32 %v569, %v573
      %v594 = vadd.f32 %v570, %v573
      %v595 = vadd.f32 %v575, 3.0
      %v596 = vadd.f32 %v576, 3.0
      %v597 = vadd.f32 %v577, 3.0
      %v598 = vadd.f32 %v578, 3.0
      %v599 = vadd.f32 %v579, 3.0
      %v600 = vadd.f32 %v580, 3.0
      %v601 = vadd.f32 %v581, 3.0
      %v602 = vadd.f32 %v582, 3.0
      %v603 = vadd.f32 %v583, 3.0
      %v604 = vadd.f32 %v584, 3.0
      %v605 = vadd.f32 %v585, 3.0
      %v606 = vadd.f32 %v586, 3.0
      %v607 = vadd.f32 %v587, 3.0
      %v608 = vadd.f32 %v588, 3.0
      %v609 = vadd.f32 %v589, 3.0
      %v610 = vadd.f32 %v590, 3.0
      %v611 = vadd.f32 %v591, 3.0
      %v612 = vadd.f32 %v592, 3.0
      %v613 = vadd.f32 %v593, 3.0
      %v614 = vadd.f32 %v594, 3.0
      %v615 = vmax.f32 %v595, 0.0
      %v616 = vmax.f32 %v596, 0.0
      %v617 = vmax.f32 %v597, 0.0
      %v618 = vmax.f32 %v598, 0.0
      %v619 = vmax.f32 %v599, 0.0
      %v620 = vmax.f32 %v600, 0.0
      %v621 = vmax.f32 %v601, 0.0
      %v622 = vmax.f32 %v602, 0.0
      %v623 = vmax.f32 %v603, 0.0
      %v624 = vmax.f32 %v604, 0.0
      %v625 = vmax.f32 %v605, 0.0
      %v626 = vmax.f32 %v606, 0.0
      %v627 = vmax.f32 %v607, 0.0
      %v628 = vmax.f32 %v608, 0.0
      %v629 = vmax.f32 %v609, 0.0
      %v630 = vmax.f32 %v610, 0.0
      %v631 = vmax.f32 %v611, 0.0
      %v632 = vmax.f32 %v612, 0.0
      %v633 = vmax.f32 %v613, 0.0
      %v634 = vmax.f32 %v614, 0.0
      %v635 = vmin.f32 %v615, 6.0
      %v636 = vmin.f32 %v616, 6.0
      %v637 = vmin.f32 %v617, 6.0
      %v638 = vmin.f32 %v618, 6.0
      %v639 = vmin.f32 %v619, 6.0
      %v640 = vmin.f32 %v620, 6.0
      %v641 = vmin.f32 %v621, 6.0
      %v642 = vmin.f32 %v622, 6.0
      %v643 = vmin.f32 %v623, 6.0
      %v644 = vmin.f32 %v624, 6.0
      %v645 = vmin.f32 %v625, 6.0
      %v646 = vmin.f32 %v626, 6.0
      %v647 = vmin.f32 %v627, 6.0
      %v648 = vmin.f32 %v628, 6.0
      %v649 = vmin.f32 %v629, 6.0
      %v650 = vmin.f32 %v630, 6.0
      %v651 = vmin.f32 %v631, 6.0
      %v652 = vmin.f32 %v632, 6.0
      %v653 = vmin.f32 %v633, 6.0
      %v654 = vmin.f32 %v634, 6.0
      %v655 = vmul.f32 %v575, %v635
      %v656 = vmul.f32 %v576, %v636
      %v657 = vmul.f32 %v577, %v637
      %v658 = vmul.f32 %v578, %v638
      %v659 = vmul.f32 %v579, %v639
      %v660 = vmul.f32 %v580, %v640
      %v661 = vmul.f32 %v581, %v641
      %v662 = vmul.f32 %v582, %v642
      %v663 = vmul.f32 %v583, %v643
      %v664 = vmul.f32 %v584, %v644
      %v665 = vmul.f32 %v585, %v645
      %v666 = vmul.f32 %v586, %v646
      %v667 = vmul.f32 %v587, %v647
      %v668 = vmul.f32 %v588, %v648
      %v669 = vmul.f32 %v589, %v649
      %v670 = vmul.f32 %v590, %v650
      %v671 = vmul.f32 %v591, %v651
      %v672 = vmul.f32 %v592, %v652
      %v673 = vmul.f32 %v593, %v653
      %v674 = vmul.f32 %v594, %v654
      %v675 = vmul.f32 %v655, 0.16666667
      %v676 = vmul.f32 %v656, 0.16666667
      %v677 = vmul.f32 %v657, 0.16666667
      %v678 = vmul.f32 %v658, 0.16666667
      %v679 = vmul.f32 %v659, 0.16666667
      %v680 = vmul.f32 %v660, 0.16666667
      %v681 = vmul.f32 %v661, 0.16666667
      %v682 = vmul.f32 %v662, 0.16666667
      %v683 = vmul.f32 %v663, 0.16666667
      %v684 = vmul.f32 %v664, 0.16666667
      %v685 = vmul.f32 %v665, 0.16666667
      %v686 = vmul.f32 %v666, 0.16666667
      %v687 = vmul.f32 %v667, 0.16666667
      %v688 = vmul.f32 %v668, 0.16666667
      %v689 = vmul.f32 %v669, 0.16666667
      %v690 = vmul.f32 %v670, 0.16666667
      %v691 = vmul.f32 %v671, 0.16666667
      %v692 = vmul.f32 %v672, 0.16666667
      %v693 = vmul.f32 %v673, 0.16666667
      %v694 = vmul.f32 %v674, 0.16666667
      %s695 = smul.u32 %s347, 24
      %s696 = scalar_lea.vmem [#allocation2], %s695
      %697 = vst.msk [vmem:[%s696 + $0x1] sm:$0xff] %vm348, %v675
      %698 = vst.msk [vmem:[%s696 + $0x9] sm:$0xff] %vm348, %v676
      %699 = vst.msk [vmem:[%s696 + $0x19] sm:$0xff] %vm348, %v677
      %700 = vst.msk [vmem:[%s696 + $0x21] sm:$0xff] %vm348, %v678
      %701 = vst.msk [vmem:[%s696 + $0x31] sm:$0xff] %vm348, %v679
      %702 = vst.msk [vmem:[%s696 + $0x39] sm:$0xff] %vm348, %v680
      %703 = vst.msk [vmem:[%s696 + $0x49] sm:$0xff] %vm348, %v681
      %704 = vst.msk [vmem:[%s696 + $0x51] sm:$0xff] %vm348, %v682
      %705 = vst.msk [vmem:[%s696 + $0x61] sm:$0xff] %vm348, %v683
      %706 = vst.msk [vmem:[%s696 + $0x69] sm:$0xff] %vm348, %v684
      %707 = vst.msk [vmem:[%s696 + $0x79] sm:$0xff] %vm348, %v685
      %708 = vst.msk [vmem:[%s696 + $0x81] sm:$0xff] %vm348, %v686
      %709 = vst.msk [vmem:[%s696 + $0x91] sm:$0xff] %vm348, %v687
      %710 = vst.msk [vmem:[%s696 + $0x99] sm:$0xff] %vm348, %v688
      %711 = vst.msk [vmem:[%s696 + $0xa9] sm:$0xff] %vm348, %v689
      %712 = vst.msk [vmem:[%s696 + $0xb1] sm:$0xff] %vm348, %v690
      %713 = vst.msk [vmem:[%s696 + $0xc1] sm:$0xff] %vm348, %v691
      %714 = vst.msk [vmem:[%s696 + $0xc9] sm:$0xff] %vm348, %v692
      %715 = vst.msk [vmem:[%s696 + $0xd9] sm:$0xff] %vm348, %v693
      %716 = vst.msk [vmem:[%s696 + $0xe1] sm:$0xff] %vm348, %v694
      %s717 = scalar_lea.vmem [#allocation2], 24
      %v718 = vld [vmem:[%s717] sm:$0xff]
      %v719 = vld [vmem:[%s717 + $0x8] sm:$0xff]
      %v720 = vld [vmem:[%s717 + $0x10] sm:$0x3]
      %v721 = vld [vmem:[%s717 + $0x18] sm:$0xff]
      %v722 = vld [vmem:[%s717 + $0x20] sm:$0xff]
      %v723 = vld [vmem:[%s717 + $0x28] sm:$0x3]
      %v724 = vld [vmem:[%s717 + $0x30] sm:$0xff]
      %v725 = vld [vmem:[%s717 + $0x38] sm:$0xff]
      %v726 = vld [vmem:[%s717 + $0x40] sm:$0x3]
      %v727 = vld [vmem:[%s717 + $0x48] sm:$0xff]
      %v728 = vld [vmem:[%s717 + $0x50] sm:$0xff]
      %v729 = vld [vmem:[%s717 + $0x58] sm:$0x3]
      %v730 = vld [vmem:[%s717 + $0x60] sm:$0xff]
      %v731 = vld [vmem:[%s717 + $0x68] sm:$0xff]
      %v732 = vld [vmem:[%s717 + $0x70] sm:$0x3]
      %v733 = vld [vmem:[%s717 + $0x78] sm:$0xff]
      %v734 = vld [vmem:[%s717 + $0x80] sm:$0xff]
      %v735 = vld [vmem:[%s717 + $0x88] sm:$0x3]
      %v736 = vld [vmem:[%s717 + $0x90] sm:$0xff]
      %v737 = vld [vmem:[%s717 + $0x98] sm:$0xff]
      %v738 = vld [vmem:[%s717 + $0xa0] sm:$0x3]
      %v739 = vld [vmem:[%s717 + $0xa8] sm:$0xff]
      %v740 = vld [vmem:[%s717 + $0xb0] sm:$0xff]
      %v741 = vld [vmem:[%s717 + $0xb8] sm:$0x3]
      %v742 = vld [vmem:[%s4] sm:$0x1]
      %v743 = vperm.slane %v742, 0
      %v744 = vmul.f32 %v718, %v743
      %v745 = vmul.f32 %v719, %v743
      %v746 = vmul.f32 %v721, %v743
      %v747 = vmul.f32 %v722, %v743
      %v748 = vmul.f32 %v724, %v743
      %v749 = vmul.f32 %v725, %v743
      %v750 = vmul.f32 %v727, %v743
      %v751 = vmul.f32 %v728, %v743
      %v752 = vmul.f32 %v730, %v743
      %v753 = vmul.f32 %v731, %v743
      %v754 = vmul.f32 %v733, %v743
      %v755 = vmul.f32 %v734, %v743
      %v756 = vmul.f32 %v736, %v743
      %v757 = vmul.f32 %v737, %v743
      %v758 = vmul.f32 %v739, %v743
      %v759 = vmul.f32 %v740, %v743
      %v760 = vadd.f32 %v744, 0.0
      %v761 = vadd.f32 %v745, 0.0
      %v762 = vadd.f32 %v746, 0.0
      %v763 = vadd.f32 %v747, 0.0
      %v764 = vadd.f32 %v748, 0.0
      %v765 = vadd.f32 %v749, 0.0
      %v766 = vadd.f32 %v750, 0.0
      %v767 = vadd.f32 %v751, 0.0
      %v768 = vadd.f32 %v752, 0.0
      %v769 = vadd.f32 %v753, 0.0
      %v770 = vadd.f32 %v754, 0.0
      %v771 = vadd.f32 %v755, 0.0
      %v772 = vadd.f32 %v756, 0.0
      %v773 = vadd.f32 %v757, 0.0
      %v774 = vadd.f32 %v758, 0.0
      %v775 = vadd.f32 %v759, 0.0
      %vm776 = vcmask 1047554
      %v777 = vrot.slane %v718, 6
      %v778 = vrot.slane %v721, 6
      %v779 = vrot.slane %v724, 6
      %v780 = vrot.slane %v727, 6
      %v781 = vrot.slane %v730, 6
      %v782 = vrot.slane %v733, 6
      %v783 = vrot.slane %v736, 6
      %v784 = vrot.slane %v739, 6
      %v785 = vsel %vm776, %v777, %v720
      %v786 = vsel %vm776, %v778, %v723
      %v787 = vsel %vm776, %v779, %v726
      %v788 = vsel %vm776, %v780, %v729
      %v789 = vsel %vm776, %v781, %v732
      %v790 = vsel %vm776, %v782, %v735
      %v791 = vsel %vm776, %v783, %v738
      %v792 = vsel %vm776, %v784, %v741
      %v793 = vld [vmem:[%s4 + $0x1] sm:$0x1]
      %v794 = vperm.slane %v793, 0
      %v795 = vmul.f32 %v718, %v794
      %v796 = vmul.f32 %v719, %v794
      %v797 = vmul.f32 %v785, %v794
      %v798 = vmul.f32 %v721, %v794
      %v799 = vmul.f32 %v722, %v794
      %v800 = vmul.f32 %v786, %v794
      %v801 = vmul.f32 %v724, %v794
      %v802 = vmul.f32 %v725, %v794
      %v803 = vmul.f32 %v787, %v794
      %v804 = vmul.f32 %v727, %v794
      %v805 = vmul.f32 %v728, %v794
      %v806 = vmul.f32 %v788, %v794
      %v807 = vmul.f32 %v730, %v794
      %v808 = vmul.f32 %v731, %v794
      %v809 = vmul.f32 %v789, %v794
      %v810 = vmul.f32 %v733, %v794
      %v811 = vmul.f32 %v734, %v794
      %v812 = vmul.f32 %v790, %v794
      %v813 = vmul.f32 %v736, %v794
      %v814 = vmul.f32 %v737, %v794
      %v815 = vmul.f32 %v791, %v794
      %v816 = vmul.f32 %v739, %v794
      %v817 = vmul.f32 %v740, %v794
      %v818 = vmul.f32 %v792, %v794
      %vm843 = vcmask 1046528
      %v844 = vrot.slane %v795, 1
      %v845 = vrot.slane %v796, 1
      %v846 = vsel %vm843, %v844, %v845
      %v847 = vrot.slane %v797, 1
      %v848 = vsel %vm843, %v845, %v847
      %v849 = vrot.slane %v798, 1
      %v850 = vrot.slane %v799, 1
      %v851 = vsel %vm843, %v849, %v850
      %v852 = vrot.slane %v800, 1
      %v853 = vsel %vm843, %v850, %v852
      %v854 = vrot.slane %v801, 1
      %v855 = vrot.slane %v802, 1
      %v856 = vsel %vm843, %v854, %v855
      %v857 = vrot.slane %v803, 1
      %v858 = vsel %vm843, %v855, %v857
      %v859 = vrot.slane %v804, 1
      %v860 = vrot.slane %v805, 1
      %v861 = vsel %vm843, %v859, %v860
      %v862 = vrot.slane %v806, 1
      %v863 = vsel %vm843, %v860, %v862
      %v864 = vrot.slane %v807, 1
      %v865 = vrot.slane %v808, 1
      %v866 = vsel %vm843, %v864, %v865
      %v867 = vrot.slane %v809, 1
      %v868 = vsel %vm843, %v865, %v867
      %v869 = vrot.slane %v810, 1
      %v870 = vrot.slane %v811, 1
      %v871 = vsel %vm843, %v869, %v870
      %v872 = vrot.slane %v812, 1
      %v873 = vsel %vm843, %v870, %v872
      %v874 = vrot.slane %v813, 1
      %v875 = vrot.slane %v814, 1
      %v876 = vsel %vm843, %v874, %v875
      %v877 = vrot.slane %v815, 1
      %v878 = vsel %vm843, %v875, %v877
      %v879 = vrot.slane %v816, 1
      %v880 = vrot.slane %v817, 1
      %v881 = vsel %vm843, %v879, %v880
      %v882 = vrot.slane %v818, 1
      %v883 = vsel %vm843, %v880, %v882
      %v900 = vadd.f32 %v760, %v846
      %v901 = vadd.f32 %v761, %v848
      %v902 = vadd.f32 %v762, %v851
      %v903 = vadd.f32 %v763, %v853
      %v904 = vadd.f32 %v764, %v856
      %v905 = vadd.f32 %v765, %v858
      %v906 = vadd.f32 %v766, %v861
      %v907 = vadd.f32 %v767, %v863
      %v908 = vadd.f32 %v768, %v866
      %v909 = vadd.f32 %v769, %v868
      %v910 = vadd.f32 %v770, %v871
      %v911 = vadd.f32 %v771, %v873
      %v912 = vadd.f32 %v772, %v876
      %v913 = vadd.f32 %v773, %v878
      %v914 = vadd.f32 %v774, %v881
      %v915 = vadd.f32 %v775, %v883
      %v916 = vld [vmem:[%s4 + $0x2] sm:$0x1]
      %v917 = vperm.slane %v916, 0
      %v918 = vmul.f32 %v718, %v917
      %v919 = vmul.f32 %v719, %v917
      %v920 = vmul.f32 %v785, %v917
      %v921 = vmul.f32 %v721, %v917
      %v922 = vmul.f32 %v722, %v917
      %v923 = vmul.f32 %v786, %v917
      %v924 = vmul.f32 %v724, %v917
      %v925 = vmul.f32 %v725, %v917
      %v926 = vmul.f32 %v787, %v917
      %v927 = vmul.f32 %v727, %v917
      %v928 = vmul.f32 %v728, %v917
      %v929 = vmul.f32 %v788, %v917
      %v930 = vmul.f32 %v730, %v917
      %v931 = vmul.f32 %v731, %v917
      %v932 = vmul.f32 %v789, %v917
      %v933 = vmul.f32 %v733, %v917
      %v934 = vmul.f32 %v734, %v917
      %v935 = vmul.f32 %v790, %v917
      %v936 = vmul.f32 %v736, %v917
      %v937 = vmul.f32 %v737, %v917
      %v938 = vmul.f32 %v791, %v917
      %v939 = vmul.f32 %v739, %v917
      %v940 = vmul.f32 %v740, %v917
      %v941 = vmul.f32 %v792, %v917
      %vm966 = vcmask 1045504
      %v967 = vrot.slane %v918, 2
      %v968 = vrot.slane %v919, 2
      %v969 = vsel %vm966, %v967, %v968
      %v970 = vrot.slane %v920, 2
      %v971 = vsel %vm966, %v968, %v970
      %v972 = vrot.slane %v921, 2
      %v973 = vrot.slane %v922, 2
      %v974 = vsel %vm966, %v972, %v973
      %v975 = vrot.slane %v923, 2
      %v976 = vsel %vm966, %v973, %v975
      %v977 = vrot.slane %v924, 2
      %v978 = vrot.slane %v925, 2
      %v979 = vsel %vm966, %v977, %v978
      %v980 = vrot.slane %v926, 2
      %v981 = vsel %vm966, %v978, %v980
      %v982 = vrot.slane %v927, 2
      %v983 = vrot.slane %v928, 2
      %v984 = vsel %vm966, %v982, %v983
      %v985 = vrot.slane %v929, 2
      %v986 = vsel %vm966, %v983, %v985
      %v987 = vrot.slane %v930, 2
      %v988 = vrot.slane %v931, 2
      %v989 = vsel %vm966, %v987, %v988
      %v990 = vrot.slane %v932, 2
      %v991 = vsel %vm966, %v988, %v990
      %v992 = vrot.slane %v933, 2
      %v993 = vrot.slane %v934, 2
      %v994 = vsel %vm966, %v992, %v993
      %v995 = vrot.slane %v935, 2
      %v996 = vsel %vm966, %v993, %v995
      %v997 = vrot.slane %v936, 2
      %v998 = vrot.slane %v937, 2
      %v999 = vsel %vm966, %v997, %v998
      %v1000 = vrot.slane %v938, 2
      %v1001 = vsel %vm966, %v998, %v1000
      %v1002 = vrot.slane %v939, 2
      %v1003 = vrot.slane %v940, 2
      %v1004 = vsel %vm966, %v1002, %v1003
      %v1005 = vrot.slane %v941, 2
      %v1006 = vsel %vm966, %v1003, %v1005
      %v1023 = vadd.f32 %v900, %v969
      %v1024 = vadd.f32 %v901, %v971
      %v1025 = vadd.f32 %v902, %v974
      %v1026 = vadd.f32 %v903, %v976
      %v1027 = vadd.f32 %v904, %v979
      %v1028 = vadd.f32 %v905, %v981
      %v1029 = vadd.f32 %v906, %v984
      %v1030 = vadd.f32 %v907, %v986
      %v1031 = vadd.f32 %v908, %v989
      %v1032 = vadd.f32 %v909, %v991
      %v1033 = vadd.f32 %v910, %v994
      %v1034 = vadd.f32 %v911, %v996
      %v1035 = vadd.f32 %v912, %v999
      %v1036 = vadd.f32 %v913, %v1001
      %v1037 = vadd.f32 %v914, %v1004
      %v1038 = vadd.f32 %v915, %v1006
      %s1039 = scalar_lea.vmem [#allocation2], 48
      %v1040 = vld [vmem:[%s1039] sm:$0xff]
      %v1041 = vld [vmem:[%s1039 + $0x8] sm:$0xff]
      %v1042 = vld [vmem:[%s1039 + $0x10] sm:$0x3]
      %v1043 = vld [vmem:[%s1039 + $0x18] sm:$0xff]
      %v1044 = vld [vmem:[%s1039 + $0x20] sm:$0xff]
      %v1045 = vld [vmem:[%s1039 + $0x28] sm:$0x3]
      %v1046 = vld [vmem:[%s1039 + $0x30] sm:$0xff]
      %v1047 = vld [vmem:[%s1039 + $0x38] sm:$0xff]
      %v1048 = vld [vmem:[%s1039 + $0x40] sm:$0x3]
      %v1049 = vld [vmem:[%s1039 + $0x48] sm:$0xff]
      %v1050 = vld [vmem:[%s1039 + $0x50] sm:$0xff]
      %v1051 = vld [vmem:[%s1039 + $0x58] sm:$0x3]
      %v1052 = vld [vmem:[%s1039 + $0x60] sm:$0xff]
      %v1053 = vld [vmem:[%s1039 + $0x68] sm:$0xff]
      %v1054 = vld [vmem:[%s1039 + $0x70] sm:$0x3]
      %v1055 = vld [vmem:[%s1039 + $0x78] sm:$0xff]
      %v1056 = vld [vmem:[%s1039 + $0x80] sm:$0xff]
      %v1057 = vld [vmem:[%s1039 + $0x88] sm:$0x3]
      %v1058 = vld [vmem:[%s1039 + $0x90] sm:$0xff]
      %v1059 = vld [vmem:[%s1039 + $0x98] sm:$0xff]
      %v1060 = vld [vmem:[%s1039 + $0xa0] sm:$0x3]
      %v1061 = vld [vmem:[%s1039 + $0xa8] sm:$0xff]
      %v1062 = vld [vmem:[%s1039 + $0xb0] sm:$0xff]
      %v1063 = vld [vmem:[%s1039 + $0xb8] sm:$0x3]
      %v1064 = vld [vmem:[%s4 + $0x3] sm:$0x1]
      %v1065 = vperm.slane %v1064, 0
      %v1066 = vmul.f32 %v1040, %v1065
      %v1067 = vmul.f32 %v1041, %v1065
      %v1068 = vmul.f32 %v1043, %v1065
      %v1069 = vmul.f32 %v1044, %v1065
      %v1070 = vmul.f32 %v1046, %v1065
      %v1071 = vmul.f32 %v1047, %v1065
      %v1072 = vmul.f32 %v1049, %v1065
      %v1073 = vmul.f32 %v1050, %v1065
      %v1074 = vmul.f32 %v1052, %v1065
      %v1075 = vmul.f32 %v1053, %v1065
      %v1076 = vmul.f32 %v1055, %v1065
      %v1077 = vmul.f32 %v1056, %v1065
      %v1078 = vmul.f32 %v1058, %v1065
      %v1079 = vmul.f32 %v1059, %v1065
      %v1080 = vmul.f32 %v1061, %v1065
      %v1081 = vmul.f32 %v1062, %v1065
      %v1082 = vadd.f32 %v1023, %v1066
      %v1083 = vadd.f32 %v1024, %v1067
      %v1084 = vadd.f32 %v1025, %v1068
      %v1085 = vadd.f32 %v1026, %v1069
      %v1086 = vadd.f32 %v1027, %v1070
      %v1087 = vadd.f32 %v1028, %v1071
      %v1088 = vadd.f32 %v1029, %v1072
      %v1089 = vadd.f32 %v1030, %v1073
      %v1090 = vadd.f32 %v1031, %v1074
      %v1091 = vadd.f32 %v1032, %v1075
      %v1092 = vadd.f32 %v1033, %v1076
      %v1093 = vadd.f32 %v1034, %v1077
      %v1094 = vadd.f32 %v1035, %v1078
      %v1095 = vadd.f32 %v1036, %v1079
      %v1096 = vadd.f32 %v1037, %v1080
      %v1097 = vadd.f32 %v1038, %v1081
      %v1098 = vrot.slane %v1040, 6
      %v1099 = vrot.slane %v1043, 6
      %v1100 = vrot.slane %v1046, 6
      %v1101 = vrot.slane %v1049, 6
      %v1102 = vrot.slane %v1052, 6
      %v1103 = vrot.slane %v1055, 6
      %v1104 = vrot.slane %v1058, 6
      %v1105 = vrot.slane %v1061, 6
      %v1106 = vsel %vm776, %v1098, %v1042
      %v1107 = vsel %vm776, %v1099, %v1045
      %v1108 = vsel %vm776, %v1100, %v1048
      %v1109 = vsel %vm776, %v1101, %v1051
      %v1110 = vsel %vm776, %v1102, %v1054
      %v1111 = vsel %vm776, %v1103, %v1057
      %v1112 = vsel %vm776, %v1104, %v1060
      %v1113 = vsel %vm776, %v1105, %v1063
      %v1114 = vld [vmem:[%s4 + $0x4] sm:$0x1]
      %v1115 = vperm.slane %v1114, 0
      %v1116 = vmul.f32 %v1040, %v1115
      %v1117 = vmul.f32 %v1041, %v1115
      %v1118 = vmul.f32 %v1106, %v1115
      %v1119 = vmul.f32 %v1043, %v1115
      %v1120 = vmul.f32 %v1044, %v1115
      %v1121 = vmul.f32 %v1107, %v1115
      %v1122 = vmul.f32 %v1046, %v1115
      %v1123 = vmul.f32 %v1047, %v1115
      %v1124 = vmul.f32 %v1108, %v1115
      %v1125 = vmul.f32 %v1049, %v1115
      %v1126 = vmul.f32 %v1050, %v1115
      %v1127 = vmul.f32 %v1109, %v1115
      %v1128 = vmul.f32 %v1052, %v1115
      %v1129 = vmul.f32 %v1053, %v1115
      %v1130 = vmul.f32 %v1110, %v1115
      %v1131 = vmul.f32 %v1055, %v1115
      %v1132 = vmul.f32 %v1056, %v1115
      %v1133 = vmul.f32 %v1111, %v1115
      %v1134 = vmul.f32 %v1058, %v1115
      %v1135 = vmul.f32 %v1059, %v1115
      %v1136 = vmul.f32 %v1112, %v1115
      %v1137 = vmul.f32 %v1061, %v1115
      %v1138 = vmul.f32 %v1062, %v1115
      %v1139 = vmul.f32 %v1113, %v1115
      %v1164 = vrot.slane %v1116, 1
      %v1165 = vrot.slane %v1117, 1
      %v1166 = vsel %vm843, %v1164, %v1165
      %v1167 = vrot.slane %v1118, 1
      %v1168 = vsel %vm843, %v1165, %v1167
      %v1169 = vrot.slane %v1119, 1
      %v1170 = vrot.slane %v1120, 1
      %v1171 = vsel %vm843, %v1169, %v1170
      %v1172 = vrot.slane %v1121, 1
      %v1173 = vsel %vm843, %v1170, %v1172
      %v1174 = vrot.slane %v1122, 1
      %v1175 = vrot.slane %v1123, 1
      %v1176 = vsel %vm843, %v1174, %v1175
      %v1177 = vrot.slane %v1124, 1
      %v1178 = vsel %vm843, %v1175, %v1177
      %v1179 = vrot.slane %v1125, 1
      %v1180 = vrot.slane %v1126, 1
      %v1181 = vsel %vm843, %v1179, %v1180
      %v1182 = vrot.slane %v1127, 1
      %v1183 = vsel %vm843, %v1180, %v1182
      %v1184 = vrot.slane %v1128, 1
      %v1185 = vrot.slane %v1129, 1
      %v1186 = vsel %vm843, %v1184, %v1185
      %v1187 = vrot.slane %v1130, 1
      %v1188 = vsel %vm843, %v1185, %v1187
      %v1189 = vrot.slane %v1131, 1
      %v1190 = vrot.slane %v1132, 1
      %v1191 = vsel %vm843, %v1189, %v1190
      %v1192 = vrot.slane %v1133, 1
      %v1193 = vsel %vm843, %v1190, %v1192
      %v1194 = vrot.slane %v1134, 1
      %v1195 = vrot.slane %v1135, 1
      %v1196 = vsel %vm843, %v1194, %v1195
      %v1197 = vrot.slane %v1136, 1
      %v1198 = vsel %vm843, %v1195, %v1197
      %v1199 = vrot.slane %v1137, 1
      %v1200 = vrot.slane %v1138, 1
      %v1201 = vsel %vm843, %v1199, %v1200
      %v1202 = vrot.slane %v1139, 1
      %v1203 = vsel %vm843, %v1200, %v1202
      %v1220 = vadd.f32 %v1082, %v1166
      %v1221 = vadd.f32 %v1083, %v1168
      %v1222 = vadd.f32 %v1084, %v1171
      %v1223 = vadd.f32 %v1085, %v1173
      %v1224 = vadd.f32 %v1086, %v1176
      %v1225 = vadd.f32 %v1087, %v1178
      %v1226 = vadd.f32 %v1088, %v1181
      %v1227 = vadd.f32 %v1089, %v1183
      %v1228 = vadd.f32 %v1090, %v1186
      %v1229 = vadd.f32 %v1091, %v1188
      %v1230 = vadd.f32 %v1092, %v1191
      %v1231 = vadd.f32 %v1093, %v1193
      %v1232 = vadd.f32 %v1094, %v1196
      %v1233 = vadd.f32 %v1095, %v1198
      %v1234 = vadd.f32 %v1096, %v1201
      %v1235 = vadd.f32 %v1097, %v1203
      %v1236 = vld [vmem:[%s4 + $0x5] sm:$0x1]
      %v1237 = vperm.slane %v1236, 0
      %v1238 = vmul.f32 %v1040, %v1237
      %v1239 = vmul.f32 %v1041, %v1237
      %v1240 = vmul.f32 %v1106, %v1237
      %v1241 = vmul.f32 %v1043, %v1237
      %v1242 = vmul.f32 %v1044, %v1237
      %v1243 = vmul.f32 %v1107, %v1237
      %v1244 = vmul.f32 %v1046, %v1237
      %v1245 = vmul.f32 %v1047, %v1237
      %v1246 = vmul.f32 %v1108, %v1237
      %v1247 = vmul.f32 %v1049, %v1237
      %v1248 = vmul.f32 %v1050, %v1237
      %v1249 = vmul.f32 %v1109, %v1237
      %v1250 = vmul.f32 %v1052, %v1237
      %v1251 = vmul.f32 %v1053, %v1237
      %v1252 = vmul.f32 %v1110, %v1237
      %v1253 = vmul.f32 %v1055, %v1237
      %v1254 = vmul.f32 %v1056, %v1237
      %v1255 = vmul.f32 %v1111, %v1237
      %v1256 = vmul.f32 %v1058, %v1237
      %v1257 = vmul.f32 %v1059, %v1237
      %v1258 = vmul.f32 %v1112, %v1237
      %v1259 = vmul.f32 %v1061, %v1237
      %v1260 = vmul.f32 %v1062, %v1237
      %v1261 = vmul.f32 %v1113, %v1237
      %v1286 = vrot.slane %v1238, 2
      %v1287 = vrot.slane %v1239, 2
      %v1288 = vsel %vm966, %v1286, %v1287
      %v1289 = vrot.slane %v1240, 2
      %v1290 = vsel %vm966, %v1287, %v1289
      %v1291 = vrot.slane %v1241, 2
      %v1292 = vrot.slane %v1242, 2
      %v1293 = vsel %vm966, %v1291, %v1292
      %v1294 = vrot.slane %v1243, 2
      %v1295 = vsel %vm966, %v1292, %v1294
      %v1296 = vrot.slane %v1244, 2
      %v1297 = vrot.slane %v1245, 2
      %v1298 = vsel %vm966, %v1296, %v1297
      %v1299 = vrot.slane %v1246, 2
      %v1300 = vsel %vm966, %v1297, %v1299
      %v1301 = vrot.slane %v1247, 2
      %v1302 = vrot.slane %v1248, 2
      %v1303 = vsel %vm966, %v1301, %v1302
      %v1304 = vrot.slane %v1249, 2
      %v1305 = vsel %vm966, %v1302, %v1304
      %v1306 = vrot.slane %v1250, 2
      %v1307 = vrot.slane %v1251, 2
      %v1308 = vsel %vm966, %v1306, %v1307
      %v1309 = vrot.slane %v1252, 2
      %v1310 = vsel %vm966, %v1307, %v1309
      %v1311 = vrot.slane %v1253, 2
      %v1312 = vrot.slane %v1254, 2
      %v1313 = vsel %vm966, %v1311, %v1312
      %v1314 = vrot.slane %v1255, 2
      %v1315 = vsel %vm966, %v1312, %v1314
      %v1316 = vrot.slane %v1256, 2
      %v1317 = vrot.slane %v1257, 2
      %v1318 = vsel %vm966, %v1316, %v1317
      %v1319 = vrot.slane %v1258, 2
      %v1320 = vsel %vm966, %v1317, %v1319
      %v1321 = vrot.slane %v1259, 2
      %v1322 = vrot.slane %v1260, 2
      %v1323 = vsel %vm966, %v1321, %v1322
      %v1324 = vrot.slane %v1261, 2
      %v1325 = vsel %vm966, %v1322, %v1324
      %v1342 = vadd.f32 %v1220, %v1288
      %v1343 = vadd.f32 %v1221, %v1290
      %v1344 = vadd.f32 %v1222, %v1293
      %v1345 = vadd.f32 %v1223, %v1295
      %v1346 = vadd.f32 %v1224, %v1298
      %v1347 = vadd.f32 %v1225, %v1300
      %v1348 = vadd.f32 %v1226, %v1303
      %v1349 = vadd.f32 %v1227, %v1305
      %v1350 = vadd.f32 %v1228, %v1308
      %v1351 = vadd.f32 %v1229, %v1310
      %v1352 = vadd.f32 %v1230, %v1313
      %v1353 = vadd.f32 %v1231, %v1315
      %v1354 = vadd.f32 %v1232, %v1318
      %v1355 = vadd.f32 %v1233, %v1320
      %v1356 = vadd.f32 %v1234, %v1323
      %v1357 = vadd.f32 %v1235, %v1325
      %s1358 = scalar_lea.vmem [#allocation2], 72
      %v1359 = vld [vmem:[%s1358] sm:$0xff]
      %v1360 = vld [vmem:[%s1358 + $0x8] sm:$0xff]
      %v1361 = vld [vmem:[%s1358 + $0x10] sm:$0x3]
      %v1362 = vld [vmem:[%s1358 + $0x18] sm:$0xff]
      %v1363 = vld [vmem:[%s1358 + $0x20] sm:$0xff]
      %v1364 = vld [vmem:[%s1358 + $0x28] sm:$0x3]
      %v1365 = vld [vmem:[%s1358 + $0x30] sm:$0xff]
      %v1366 = vld [vmem:[%s1358 + $0x38] sm:$0xff]
      %v1367 = vld [vmem:[%s1358 + $0x40] sm:$0x3]
      %v1368 = vld [vmem:[%s1358 + $0x48] sm:$0xff]
      %v1369 = vld [vmem:[%s1358 + $0x50] sm:$0xff]
      %v1370 = vld [vmem:[%s1358 + $0x58] sm:$0x3]
      %v1371 = vld [vmem:[%s1358 + $0x60] sm:$0xff]
      %v1372 = vld [vmem:[%s1358 + $0x68] sm:$0xff]
      %v1373 = vld [vmem:[%s1358 + $0x70] sm:$0x3]
      %v1374 = vld [vmem:[%s1358 + $0x78] sm:$0xff]
      %v1375 = vld [vmem:[%s1358 + $0x80] sm:$0xff]
      %v1376 = vld [vmem:[%s1358 + $0x88] sm:$0x3]
      %v1377 = vld [vmem:[%s1358 + $0x90] sm:$0xff]
      %v1378 = vld [vmem:[%s1358 + $0x98] sm:$0xff]
      %v1379 = vld [vmem:[%s1358 + $0xa0] sm:$0x3]
      %v1380 = vld [vmem:[%s1358 + $0xa8] sm:$0xff]
      %v1381 = vld [vmem:[%s1358 + $0xb0] sm:$0xff]
      %v1382 = vld [vmem:[%s1358 + $0xb8] sm:$0x3]
      %v1383 = vld [vmem:[%s4 + $0x6] sm:$0x1]
      %v1384 = vperm.slane %v1383, 0
      %v1385 = vmul.f32 %v1359, %v1384
      %v1386 = vmul.f32 %v1360, %v1384
      %v1387 = vmul.f32 %v1362, %v1384
      %v1388 = vmul.f32 %v1363, %v1384
      %v1389 = vmul.f32 %v1365, %v1384
      %v1390 = vmul.f32 %v1366, %v1384
      %v1391 = vmul.f32 %v1368, %v1384
      %v1392 = vmul.f32 %v1369, %v1384
      %v1393 = vmul.f32 %v1371, %v1384
      %v1394 = vmul.f32 %v1372, %v1384
      %v1395 = vmul.f32 %v1374, %v1384
      %v1396 = vmul.f32 %v1375, %v1384
      %v1397 = vmul.f32 %v1377, %v1384
      %v1398 = vmul.f32 %v1378, %v1384
      %v1399 = vmul.f32 %v1380, %v1384
      %v1400 = vmul.f32 %v1381, %v1384
      %v1401 = vadd.f32 %v1342, %v1385
      %v1402 = vadd.f32 %v1343, %v1386
      %v1403 = vadd.f32 %v1344, %v1387
      %v1404 = vadd.f32 %v1345, %v1388
      %v1405 = vadd.f32 %v1346, %v1389
      %v1406 = vadd.f32 %v1347, %v1390
      %v1407 = vadd.f32 %v1348, %v1391
      %v1408 = vadd.f32 %v1349, %v1392
      %v1409 = vadd.f32 %v1350, %v1393
      %v1410 = vadd.f32 %v1351, %v1394
      %v1411 = vadd.f32 %v1352, %v1395
      %v1412 = vadd.f32 %v1353, %v1396
      %v1413 = vadd.f32 %v1354, %v1397
      %v1414 = vadd.f32 %v1355, %v1398
      %v1415 = vadd.f32 %v1356, %v1399
      %v1416 = vadd.f32 %v1357, %v1400
      %v1417 = vrot.slane %v1359, 6
      %v1418 = vrot.slane %v1362, 6
      %v1419 = vrot.slane %v1365, 6
      %v1420 = vrot.slane %v1368, 6
      %v1421 = vrot.slane %v1371, 6
      %v1422 = vrot.slane %v1374, 6
      %v1423 = vrot.slane %v1377, 6
      %v1424 = vrot.slane %v1380, 6
      %v1425 = vsel %vm776, %v1417, %v1361
      %v1426 = vsel %vm776, %v1418, %v1364
      %v1427 = vsel %vm776, %v1419, %v1367
      %v1428 = vsel %vm776, %v1420, %v1370
      %v1429 = vsel %vm776, %v1421, %v1373
      %v1430 = vsel %vm776, %v1422, %v1376
      %v1431 = vsel %vm776, %v1423, %v1379
      %v1432 = vsel %vm776, %v1424, %v1382
      %v1433 = vld [vmem:[%s4 + $0x7] sm:$0x1]
      %v1434 = vperm.slane %v1433, 0
      %v1435 = vmul.f32 %v1359, %v1434
      %v1436 = vmul.f32 %v1360, %v1434
      %v1437 = vmul.f32 %v1425, %v1434
      %v1438 = vmul.f32 %v1362, %v1434
      %v1439 = vmul.f32 %v1363, %v1434
      %v1440 = vmul.f32 %v1426, %v1434
      %v1441 = vmul.f32 %v1365, %v1434
      %v1442 = vmul.f32 %v1366, %v1434
      %v1443 = vmul.f32 %v1427, %v1434
      %v1444 = vmul.f32 %v1368, %v1434
      %v1445 = vmul.f32 %v1369, %v1434
      %v1446 = vmul.f32 %v1428, %v1434
      %v1447 = vmul.f32 %v1371, %v1434
      %v1448 = vmul.f32 %v1372, %v1434
      %v1449 = vmul.f32 %v1429, %v1434
      %v1450 = vmul.f32 %v1374, %v1434
      %v1451 = vmul.f32 %v1375, %v1434
      %v1452 = vmul.f32 %v1430, %v1434
      %v1453 = vmul.f32 %v1377, %v1434
      %v1454 = vmul.f32 %v1378, %v1434
      %v1455 = vmul.f32 %v1431, %v1434
      %v1456 = vmul.f32 %v1380, %v1434
      %v1457 = vmul.f32 %v1381, %v1434
      %v1458 = vmul.f32 %v1432, %v1434
      %v1483 = vrot.slane %v1435, 1
      %v1484 = vrot.slane %v1436, 1
      %v1485 = vsel %vm843, %v1483, %v1484
      %v1486 = vrot.slane %v1437, 1
      %v1487 = vsel %vm843, %v1484, %v1486
      %v1488 = vrot.slane %v1438, 1
      %v1489 = vrot.slane %v1439, 1
      %v1490 = vsel %vm843, %v1488, %v1489
      %v1491 = vrot.slane %v1440, 1
      %v1492 = vsel %vm843, %v1489, %v1491
      %v1493 = vrot.slane %v1441, 1
      %v1494 = vrot.slane %v1442, 1
      %v1495 = vsel %vm843, %v1493, %v1494
      %v1496 = vrot.slane %v1443, 1
      %v1497 = vsel %vm843, %v1494, %v1496
      %v1498 = vrot.slane %v1444, 1
      %v1499 = vrot.slane %v1445, 1
      %v1500 = vsel %vm843, %v1498, %v1499
      %v1501 = vrot.slane %v1446, 1
      %v1502 = vsel %vm843, %v1499, %v1501
      %v1503 = vrot.slane %v1447, 1
      %v1504 = vrot.slane %v1448, 1
      %v1505 = vsel %vm843, %v1503, %v1504
      %v1506 = vrot.slane %v1449, 1
      %v1507 = vsel %vm843, %v1504, %v1506
      %v1508 = vrot.slane %v1450, 1
      %v1509 = vrot.slane %v1451, 1
      %v1510 = vsel %vm843, %v1508, %v1509
      %v1511 = vrot.slane %v1452, 1
      %v1512 = vsel %vm843, %v1509, %v1511
      %v1513 = vrot.slane %v1453, 1
      %v1514 = vrot.slane %v1454, 1
      %v1515 = vsel %vm843, %v1513, %v1514
      %v1516 = vrot.slane %v1455, 1
      %v1517 = vsel %vm843, %v1514, %v1516
      %v1518 = vrot.slane %v1456, 1
      %v1519 = vrot.slane %v1457, 1
      %v1520 = vsel %vm843, %v1518, %v1519
      %v1521 = vrot.slane %v1458, 1
      %v1522 = vsel %vm843, %v1519, %v1521
      %v1539 = vadd.f32 %v1401, %v1485
      %v1540 = vadd.f32 %v1402, %v1487
      %v1541 = vadd.f32 %v1403, %v1490
      %v1542 = vadd.f32 %v1404, %v1492
      %v1543 = vadd.f32 %v1405, %v1495
      %v1544 = vadd.f32 %v1406, %v1497
      %v1545 = vadd.f32 %v1407, %v1500
      %v1546 = vadd.f32 %v1408, %v1502
      %v1547 = vadd.f32 %v1409, %v1505
      %v1548 = vadd.f32 %v1410, %v1507
      %v1549 = vadd.f32 %v1411, %v1510
      %v1550 = vadd.f32 %v1412, %v1512
      %v1551 = vadd.f32 %v1413, %v1515
      %v1552 = vadd.f32 %v1414, %v1517
      %v1553 = vadd.f32 %v1415, %v1520
      %v1554 = vadd.f32 %v1416, %v1522
      %v1555 = vld [vmem:[%s4 + $0x8] sm:$0x1]
      %v1556 = vperm.slane %v1555, 0
      %v1557 = vmul.f32 %v1359, %v1556
      %v1558 = vmul.f32 %v1360, %v1556
      %v1559 = vmul.f32 %v1425, %v1556
      %v1560 = vmul.f32 %v1362, %v1556
      %v1561 = vmul.f32 %v1363, %v1556
      %v1562 = vmul.f32 %v1426, %v1556
      %v1563 = vmul.f32 %v1365, %v1556
      %v1564 = vmul.f32 %v1366, %v1556
      %v1565 = vmul.f32 %v1427, %v1556
      %v1566 = vmul.f32 %v1368, %v1556
      %v1567 = vmul.f32 %v1369, %v1556
      %v1568 = vmul.f32 %v1428, %v1556
      %v1569 = vmul.f32 %v1371, %v1556
      %v1570 = vmul.f32 %v1372, %v1556
      %v1571 = vmul.f32 %v1429, %v1556
      %v1572 = vmul.f32 %v1374, %v1556
      %v1573 = vmul.f32 %v1375, %v1556
      %v1574 = vmul.f32 %v1430, %v1556
      %v1575 = vmul.f32 %v1377, %v1556
      %v1576 = vmul.f32 %v1378, %v1556
      %v1577 = vmul.f32 %v1431, %v1556
      %v1578 = vmul.f32 %v1380, %v1556
      %v1579 = vmul.f32 %v1381, %v1556
      %v1580 = vmul.f32 %v1432, %v1556
      %v1605 = vrot.slane %v1557, 2
      %v1606 = vrot.slane %v1558, 2
      %v1607 = vsel %vm966, %v1605, %v1606
      %v1608 = vrot.slane %v1559, 2
      %v1609 = vsel %vm966, %v1606, %v1608
      %v1610 = vrot.slane %v1560, 2
      %v1611 = vrot.slane %v1561, 2
      %v1612 = vsel %vm966, %v1610, %v1611
      %v1613 = vrot.slane %v1562, 2
      %v1614 = vsel %vm966, %v1611, %v1613
      %v1615 = vrot.slane %v1563, 2
      %v1616 = vrot.slane %v1564, 2
      %v1617 = vsel %vm966, %v1615, %v1616
      %v1618 = vrot.slane %v1565, 2
      %v1619 = vsel %vm966, %v1616, %v1618
      %v1620 = vrot.slane %v1566, 2
      %v1621 = vrot.slane %v1567, 2
      %v1622 = vsel %vm966, %v1620, %v1621
      %v1623 = vrot.slane %v1568, 2
      %v1624 = vsel %vm966, %v1621, %v1623
      %v1625 = vrot.slane %v1569, 2
      %v1626 = vrot.slane %v1570, 2
      %v1627 = vsel %vm966, %v1625, %v1626
      %v1628 = vrot.slane %v1571, 2
      %v1629 = vsel %vm966, %v1626, %v1628
      %v1630 = vrot.slane %v1572, 2
      %v1631 = vrot.slane %v1573, 2
      %v1632 = vsel %vm966, %v1630, %v1631
      %v1633 = vrot.slane %v1574, 2
      %v1634 = vsel %vm966, %v1631, %v1633
      %v1635 = vrot.slane %v1575, 2
      %v1636 = vrot.slane %v1576, 2
      %v1637 = vsel %vm966, %v1635, %v1636
      %v1638 = vrot.slane %v1577, 2
      %v1639 = vsel %vm966, %v1636, %v1638
      %v1640 = vrot.slane %v1578, 2
      %v1641 = vrot.slane %v1579, 2
      %v1642 = vsel %vm966, %v1640, %v1641
      %v1643 = vrot.slane %v1580, 2
      %v1644 = vsel %vm966, %v1641, %v1643
      %v1661 = vadd.f32 %v1539, %v1607
      %v1662 = vadd.f32 %v1540, %v1609
      %v1663 = vadd.f32 %v1541, %v1612
      %v1664 = vadd.f32 %v1542, %v1614
      %v1665 = vadd.f32 %v1543, %v1617
      %v1666 = vadd.f32 %v1544, %v1619
      %v1667 = vadd.f32 %v1545, %v1622
      %v1668 = vadd.f32 %v1546, %v1624
      %v1669 = vadd.f32 %v1547, %v1627
      %v1670 = vadd.f32 %v1548, %v1629
      %v1671 = vadd.f32 %v1549, %v1632
      %v1672 = vadd.f32 %v1550, %v1634
      %v1673 = vadd.f32 %v1551, %v1637
      %v1674 = vadd.f32 %v1552, %v1639
      %v1675 = vadd.f32 %v1553, %v1642
      %v1676 = vadd.f32 %v1554, %v1644
      %v1677 = vld [vmem:[%s5] sm:$0x1]
      %v1679 = vperm.slane %v1677, 0
      %v1681 = vmul.f32 %v1661, %v1679
      %v1682 = vmul.f32 %v1662, %v1679
      %v1683 = vmul.f32 %v1663, %v1679
      %v1684 = vmul.f32 %v1664, %v1679
      %v1685 = vmul.f32 %v1665, %v1679
      %v1686 = vmul.f32 %v1666, %v1679
      %v1687 = vmul.f32 %v1667, %v1679
      %v1688 = vmul.f32 %v1668, %v1679
      %v1689 = vmul.f32 %v1669, %v1679
      %v1690 = vmul.f32 %v1670, %v1679
      %v1691 = vmul.f32 %v1671, %v1679
      %v1692 = vmul.f32 %v1672, %v1679
      %v1693 = vmul.f32 %v1673, %v1679
      %v1694 = vmul.f32 %v1674, %v1679
      %v1695 = vmul.f32 %v1675, %v1679
      %v1696 = vmul.f32 %v1676, %v1679
      %v1697 = vld [vmem:[%s6] sm:$0x1]
      %v1699 = vperm.slane %v1697, 0
      %v1701 = vadd.f32 %v1681, %v1699
      %v1702 = vadd.f32 %v1682, %v1699
      %v1703 = vadd.f32 %v1683, %v1699
      %v1704 = vadd.f32 %v1684, %v1699
      %v1705 = vadd.f32 %v1685, %v1699
      %v1706 = vadd.f32 %v1686, %v1699
      %v1707 = vadd.f32 %v1687, %v1699
      %v1708 = vadd.f32 %v1688, %v1699
      %v1709 = vadd.f32 %v1689, %v1699
      %v1710 = vadd.f32 %v1690, %v1699
      %v1711 = vadd.f32 %v1691, %v1699
      %v1712 = vadd.f32 %v1692, %v1699
      %v1713 = vadd.f32 %v1693, %v1699
      %v1714 = vadd.f32 %v1694, %v1699
      %v1715 = vadd.f32 %v1695, %v1699
      %v1716 = vadd.f32 %v1696, %v1699
      %v1717 = vadd.f32 %v1701, 3.0
      %v1718 = vadd.f32 %v1702, 3.0
      %v1719 = vadd.f32 %v1703, 3.0
      %v1720 = vadd.f32 %v1704, 3.0
      %v1721 = vadd.f32 %v1705, 3.0
      %v1722 = vadd.f32 %v1706, 3.0
      %v1723 = vadd.f32 %v1707, 3.0
      %v1724 = vadd.f32 %v1708, 3.0
      %v1725 = vadd.f32 %v1709, 3.0
      %v1726 = vadd.f32 %v1710, 3.0
      %v1727 = vadd.f32 %v1711, 3.0
      %v1728 = vadd.f32 %v1712, 3.0
      %v1729 = vadd.f32 %v1713, 3.0
      %v1730 = vadd.f32 %v1714, 3.0
      %v1731 = vadd.f32 %v1715, 3.0
      %v1732 = vadd.f32 %v1716, 3.0
      %v1733 = vmax.f32 %v1717, 0.0
      %v1734 = vmax.f32 %v1718, 0.0
      %v1735 = vmax.f32 %v1719, 0.0
      %v1736 = vmax.f32 %v1720, 0.0
      %v1737 = vmax.f32 %v1721, 0.0
      %v1738 = vmax.f32 %v1722, 0.0
      %v1739 = vmax.f32 %v1723, 0.0
      %v1740 = vmax.f32 %v1724, 0.0
      %v1741 = vmax.f32 %v1725, 0.0
      %v1742 = vmax.f32 %v1726, 0.0
      %v1743 = vmax.f32 %v1727, 0.0
      %v1744 = vmax.f32 %v1728, 0.0
      %v1745 = vmax.f32 %v1729, 0.0
      %v1746 = vmax.f32 %v1730, 0.0
      %v1747 = vmax.f32 %v1731, 0.0
      %v1748 = vmax.f32 %v1732, 0.0
      %v1749 = vmin.f32 %v1733, 6.0
      %v1750 = vmin.f32 %v1734, 6.0
      %v1751 = vmin.f32 %v1735, 6.0
      %v1752 = vmin.f32 %v1736, 6.0
      %v1753 = vmin.f32 %v1737, 6.0
      %v1754 = vmin.f32 %v1738, 6.0
      %v1755 = vmin.f32 %v1739, 6.0
      %v1756 = vmin.f32 %v1740, 6.0
      %v1757 = vmin.f32 %v1741, 6.0
      %v1758 = vmin.f32 %v1742, 6.0
      %v1759 = vmin.f32 %v1743, 6.0
      %v1760 = vmin.f32 %v1744, 6.0
      %v1761 = vmin.f32 %v1745, 6.0
      %v1762 = vmin.f32 %v1746, 6.0
      %v1763 = vmin.f32 %v1747, 6.0
      %v1764 = vmin.f32 %v1748, 6.0
      %v1765 = vmul.f32 %v1701, %v1749
      %v1766 = vmul.f32 %v1702, %v1750
      %v1767 = vmul.f32 %v1703, %v1751
      %v1768 = vmul.f32 %v1704, %v1752
      %v1769 = vmul.f32 %v1705, %v1753
      %v1770 = vmul.f32 %v1706, %v1754
      %v1771 = vmul.f32 %v1707, %v1755
      %v1772 = vmul.f32 %v1708, %v1756
      %v1773 = vmul.f32 %v1709, %v1757
      %v1774 = vmul.f32 %v1710, %v1758
      %v1775 = vmul.f32 %v1711, %v1759
      %v1776 = vmul.f32 %v1712, %v1760
      %v1777 = vmul.f32 %v1713, %v1761
      %v1778 = vmul.f32 %v1714, %v1762
      %v1779 = vmul.f32 %v1715, %v1763
      %v1780 = vmul.f32 %v1716, %v1764
      %v1781 = vmul.f32 %v1765, 0.16666667
      %v1782 = vmul.f32 %v1766, 0.16666667
      %v1783 = vmul.f32 %v1767, 0.16666667
      %v1784 = vmul.f32 %v1768, 0.16666667
      %v1785 = vmul.f32 %v1769, 0.16666667
      %v1786 = vmul.f32 %v1770, 0.16666667
      %v1787 = vmul.f32 %v1771, 0.16666667
      %v1788 = vmul.f32 %v1772, 0.16666667
      %v1789 = vmul.f32 %v1773, 0.16666667
      %v1790 = vmul.f32 %v1774, 0.16666667
      %v1791 = vmul.f32 %v1775, 0.16666667
      %v1792 = vmul.f32 %v1776, 0.16666667
      %v1793 = vmul.f32 %v1777, 0.16666667
      %v1794 = vmul.f32 %v1778, 0.16666667
      %v1795 = vmul.f32 %v1779, 0.16666667
      %v1796 = vmul.f32 %v1780, 0.16666667
      %1797 = vst.msk [vmem:[%s335] sm:$0xff] %vm348, %v1781
      %1798 = vst.msk [vmem:[%s335 + $0x8] sm:$0xff] %vm348, %v1782
      %1799 = vst.msk [vmem:[%s335 + $0x10] sm:$0xff] %vm348, %v1783
      %1800 = vst.msk [vmem:[%s335 + $0x18] sm:$0xff] %vm348, %v1784
      %1801 = vst.msk [vmem:[%s335 + $0x20] sm:$0xff] %vm348, %v1785
      %1802 = vst.msk [vmem:[%s335 + $0x28] sm:$0xff] %vm348, %v1786
      %1803 = vst.msk [vmem:[%s335 + $0x30] sm:$0xff] %vm348, %v1787
      %1804 = vst.msk [vmem:[%s335 + $0x38] sm:$0xff] %vm348, %v1788
      %1805 = vst.msk [vmem:[%s335 + $0x40] sm:$0xff] %vm348, %v1789
      %1806 = vst.msk [vmem:[%s335 + $0x48] sm:$0xff] %vm348, %v1790
      %1807 = vst.msk [vmem:[%s335 + $0x50] sm:$0xff] %vm348, %v1791
      %1808 = vst.msk [vmem:[%s335 + $0x58] sm:$0xff] %vm348, %v1792
      %1809 = vst.msk [vmem:[%s335 + $0x60] sm:$0xff] %vm348, %v1793
      %1810 = vst.msk [vmem:[%s335 + $0x68] sm:$0xff] %vm348, %v1794
      %1811 = vst.msk [vmem:[%s335 + $0x70] sm:$0xff] %vm348, %v1795
      %1812 = vst.msk [vmem:[%s335 + $0x78] sm:$0xff] %vm348, %v1796
      %p1813 = scmp.eq.s32.totalorder %s25, 0
      // Predicated region
      $region49: #{residual_unit_forward.2} parent=47 // pred_check
        %p1814 = pneg %p1813
      $region50: #{residual_unit_forward.2} parent=47 // pred_check_branch
        %1816 = sbr.rel (%p1814) target = $region52
      $region51: #{residual_unit_forward.2} parent=47 // pred_region
        %vm1817 = vcmask 122880
        %1818 = vst.msk [vmem:[#allocation3] sm:$0x1] %vm1817, 0.0
      $region52: #{residual_unit_forward.2} parent=47 // pred_fallthru
        _
      %v1819 = vld [vmem:[#allocation3] sm:$0x1]
      %v1820 = vsel %vm348, %v1781, 0.0
      %v1821 = vsel %vm348, %v1782, 0.0
      %v1822 = vadd.f32 %v1820, %v1821
      %v1823 = vsel %vm348, %v1783, 0.0
      %v1824 = vadd.f32 %v1822, %v1823
      %v1825 = vsel %vm348, %v1784, 0.0
      %v1826 = vadd.f32 %v1824, %v1825
      %v1827 = vsel %vm348, %v1785, 0.0
      %v1828 = vadd.f32 %v1826, %v1827
      %v1829 = vsel %vm348, %v1786, 0.0
      %v1830 = vadd.f32 %v1828, %v1829
      %v1831 = vsel %vm348, %v1787, 0.0
      %v1832 = vadd.f32 %v1830, %v1831
      %v1833 = vsel %vm348, %v1788, 0.0
      %v1834 = vadd.f32 %v1832, %v1833
      %v1835 = vsel %vm348, %v1789, 0.0
      %v1836 = vadd.f32 %v1834, %v1835
      %v1837 = vsel %vm348, %v1790, 0.0
      %v1838 = vadd.f32 %v1836, %v1837
      %v1839 = vsel %vm348, %v1791, 0.0
      %v1840 = vadd.f32 %v1838, %v1839
      %v1841 = vsel %vm348, %v1792, 0.0
      %v1842 = vadd.f32 %v1840, %v1841
      %v1843 = vsel %vm348, %v1793, 0.0
      %v1844 = vadd.f32 %v1842, %v1843
      %v1845 = vsel %vm348, %v1794, 0.0
      %v1846 = vadd.f32 %v1844, %v1845
      %v1847 = vsel %vm348, %v1795, 0.0
      %v1848 = vadd.f32 %v1846, %v1847
      %v1849 = vsel %vm348, %v1796, 0.0
      %v1850 = vadd.f32 %v1848, %v1849
      %v1851 = vrot.slane %v1850, 4
      %v1852 = vadd.f32 %v1850, %v1851
      %v1853 = vrot.slane %v1852, 2
      %v1854 = vadd.f32 %v1852, %v1853
      %v1855 = vrot.slane %v1854, 1
      %v1856 = vadd.f32 %v1854, %v1855
      %v1857 = vadd.f32 %v1819, %v1856
      %vm1858 = vcmask 122880
      %1859 = vst.msk [vmem:[#allocation3] sm:$0x1] %vm1858, %v1857
      %p1860 = scmp.eq.s32.totalorder %s25, 1
      // Predicated region
      $region53: #{residual_unit_forward.2} parent=47 // pred_check
        %p1861 = pneg %p1860
      $region54: #{residual_unit_forward.2} parent=47 // pred_check_branch
        %1863 = sbr.rel (%p1861) target = $region56
      $region55: #{residual_unit_forward.2} parent=47 // pred_region
        %v1864 = vld [vmem:[#allocation3] sm:$0x1]
        %v1865 = vmul.f32 %v1864, 0.00390625
        %1866 = vst.msk [vmem:[%s339] sm:$0x1] %vm1858, %v1865
      $region56: #{residual_unit_forward.2} parent=47 // pred_fallthru
        _
      %s1867 = smul.u32 8, %s25
      %p1868 = scmp.lt.s32.totalorder %s24, 1
      %s1869 = scalar_select %p1868, %s24, 1
      %p1870 = scmp.lt.s32.totalorder %s1867, 15
      %s1871 = scalar_select %p1870, %s1867, 15
      %s1872 = smul.addr %s1871, 2
      %s1873 = smul.addr %s1869, 32
      %s1874 = sadd.s32 %s1872, %s1873
      %s1875 = smul.addr %s1874, 8
      %s1876 = scalar_lea.vmem %s7, %s1875
      %p1877 = scmp.lt.s32.totalorder %s24, 1
      %s1878 = scalar_select %p1877, %s24, 1
      %s1879 = scalar_lea.vmem %s8, %s1878
      // Predicated region
      $region57: #{residual_unit_forward.2} parent=47 // pred_check
        %p1880 = pneg %p204
      $region58: #{residual_unit_forward.2} parent=47 // pred_check_branch
        %1882 = sbr.rel (%p1880) target = $region60
      $region59: #{residual_unit_forward.2} parent=47 // pred_region
        %s1883 = smul.u32 8, %s25
      $region60: #{residual_unit_forward.2} parent=47 // pred_fallthru
        _
      // Predicated region
      $region61: #{residual_unit_forward.2} parent=47 // pred_check
        %p1884 = pneg %p230
      $region62: #{residual_unit_forward.2} parent=47 // pred_check_branch
        %1886 = sbr.rel (%p1884) target = $region64
      $region63: #{residual_unit_forward.2} parent=47 // pred_region
        _
      $region64: #{residual_unit_forward.2} parent=47 // pred_fallthru
        _
    $region48: #{residual_unit_forward.2} parent=5 // pred_fallthru
      _
    %p1887 = scmp.le.s32.totalorder 2, %s15
    // Predicated region
    $region65: #{residual_unit_forward.2} parent=5 // pred_check
      %p1888 = pneg %p1887
    $region66: #{residual_unit_forward.2} parent=5 // pred_check_branch
      %1890 = sbr.rel (%p1888) target = $region68
    $region67: #{residual_unit_forward.2} parent=5 // pred_region
      %s1891 = ssub.s32 %s15, 2
      // Predicated region
      $region69: #{residual_unit_forward.2} parent=67 // pred_check
        %p1892 = pneg %p210
      $region70: #{residual_unit_forward.2} parent=67 // pred_check_branch
        %1894 = sbr.rel (%p1892) target = $region72
      $region71: #{residual_unit_forward.2} parent=67 // pred_region
        %s1895 = smul.u32 8, %s27
        %p1896 = scmp.lt.s32.totalorder %s26, 1
        %s1897 = scalar_select %p1896, %s26, 1
        %p1898 = scmp.lt.s32.totalorder %s1895, 15
        %s1899 = scalar_select %p1898, %s1895, 15
        %s1900 = smul.addr %s1899, 2
        %s1901 = smul.addr %s1897, 32
        %s1902 = sadd.s32 %s1900, %s1901
        %s1903 = smul.addr %s1902, 8
        %s1904 = scalar_lea.vmem %s7, %s1903
      $region72: #{residual_unit_forward.2} parent=67 // pred_fallthru
        _
      // Predicated region
      $region73: #{residual_unit_forward.2} parent=67 // pred_check
        %p1905 = pneg %p236
      $region74: #{residual_unit_forward.2} parent=67 // pred_check_branch
        %1907 = sbr.rel (%p1905) target = $region76
      $region75: #{residual_unit_forward.2} parent=67 // pred_region
        %p1908 = scmp.lt.s32.totalorder %s26, 1
        %s1909 = scalar_select %p1908, %s26, 1
        %s1910 = scalar_lea.vmem %s8, %s1909
      $region76: #{residual_unit_forward.2} parent=67 // pred_fallthru
        _
    $region68: #{residual_unit_forward.2} parent=5 // pred_fallthru
      _
  $region6: #{residual_unit_forward.2} parent=0 // loop_footer
    %s19 = sadd.s32 1, %s15
  $region7: #{residual_unit_forward.2} parent=0 // loop_footer_branch
    %14 = sbr.rel target = $region3
  $region8: #{residual_unit_forward.2} parent=0 // loop_exit
    _

</llo_original>
